<compile_context>
chip_gen: v5e
topology: v5e:2x2
jax: 0.10.0
libtpu: 0.0.40
codegen_flags: <defaults>
</compile_context>

<pallas_src>
import functools

import jax
import jax.numpy as jnp
from jax.experimental import pallas as pl
from jax.experimental.pallas import tpu as pltpu

NUM_HIDDEN_LAYERS = 5                # PyTorch module default
NUM_LINEAR = NUM_HIDDEN_LAYERS + 2   # 7 Linear layers total


def _round_up(x, m):
    return ((x + m - 1) // m) * m


# --------------------------------------------------------------------------- #
# Kernel
# --------------------------------------------------------------------------- #
def _mlp_kernel(x_ref, w_in_ref, b_in_ref, w_hid_ref, b_hid_ref,
                w_out_ref, b_out_ref, out_ref, *, num_hidden):
    """One batch tile through the whole MLP.

    x_ref     : (tm, input_size)          f32
    w_in_ref  : (input_size, P_h)         param_dtype   (cols zero-padded)
    b_in_ref  : (1, P_h)                  f32
    w_hid_ref : (num_hidden, P_h, P_h)    param_dtype   (rows/cols zero-padded)
    b_hid_ref : (num_hidden, 1, P_h)      f32
    w_out_ref : (P_h, P_out)              param_dtype   (rows/cols zero-padded)
    b_out_ref : (1, P_out)                f32
    out_ref   : (tm, P_out)               f32

    Padding rows/columns of every weight/bias are zero, so padded lanes stay
    exactly zero through all layers and the "real" lanes match the unpadded MLP.
    Bias-add and ReLU are kept in f32 (v5e's VPU has no bf16); matmuls run in
    the weights' storage dtype on the MXU with f32 accumulation.
    """
    w_dtype = w_hid_ref.dtype

    # Input layer + ReLU.
    h = jnp.dot(x_ref[...].astype(w_dtype), w_in_ref[...],
                preferred_element_type=jnp.float32)
    h = jnp.maximum(h + b_in_ref[...], 0.0)

    # Hidden layers + ReLU (static unroll; num_hidden is small and fixed).
    for k in range(num_hidden):
        h = jnp.dot(h.astype(w_dtype), w_hid_ref[k],
                    preferred_element_type=jnp.float32)
        h = jnp.maximum(h + b_hid_ref[k], 0.0)

    # Output layer (no ReLU).
    y = jnp.dot(h.astype(w_dtype), w_out_ref[...],
                preferred_element_type=jnp.float32)
    out_ref[...] = (y + b_out_ref[...]).astype(out_ref.dtype)


# --------------------------------------------------------------------------- #
# Parameter packing (done ONCE, outside the per-call hot path)
# --------------------------------------------------------------------------- #
def pack_params(weights, biases, param_dtype=jnp.float32):
    """Pad/stack nn.Linear parameters into lane-dense kernel inputs.

    weights[k]: (in_k, out_k)  (transposed vs. torch); biases[k]: (1, out_k).
    Weights are stored in `param_dtype` (f32 or bf16); biases stay f32.
    """
    num_linear = len(weights)
    assert num_linear >= 3, "need at least input + 1 hidden + output layer"
    num_hidden = num_linear - 2

    input_size = weights[0].shape[0]
    hidden_size = weights[0].shape[1]
    output_size = weights[-1].shape[1]
    P_h = _round_up(hidden_size, 128)
    P_out = _round_up(output_size, 128)

    w_in = jnp.zeros((input_size, P_h), dtype=jnp.float32)
    w_in = w_in.at[:, :hidden_size].set(weights[0].astype(jnp.float32))
    b_in = jnp.zeros((1, P_h), dtype=jnp.float32)
    b_in = b_in.at[:, :hidden_size].set(
        biases[0].reshape(1, -1).astype(jnp.float32))

    w_hid = jnp.zeros((num_hidden, P_h, P_h), dtype=jnp.float32)
    b_hid = jnp.zeros((num_hidden, 1, P_h), dtype=jnp.float32)
    for k in range(num_hidden):
        w, b = weights[1 + k], biases[1 + k]
        w_hid = w_hid.at[k, :w.shape[0], :w.shape[1]].set(w.astype(jnp.float32))
        b_hid = b_hid.at[k, :, :b.shape[-1]].set(
            b.reshape(1, -1).astype(jnp.float32))

    w_out = jnp.zeros((P_h, P_out), dtype=jnp.float32)
    w_out = w_out.at[:hidden_size, :output_size].set(
        weights[-1].astype(jnp.float32))
    b_out = jnp.zeros((1, P_out), dtype=jnp.float32)
    b_out = b_out.at[:, :output_size].set(
        biases[-1].reshape(1, -1).astype(jnp.float32))

    return dict(
        w_in=w_in.astype(param_dtype), b_in=b_in,
        w_hid=w_hid.astype(param_dtype), b_hid=b_hid,
        w_out=w_out.astype(param_dtype), b_out=b_out,
        num_hidden=num_hidden, input_size=input_size,
        hidden_size=hidden_size, output_size=output_size,
        P_h=P_h, P_out=P_out,
    )


# --------------------------------------------------------------------------- #
# Wrapper
# --------------------------------------------------------------------------- #
def time_series_predictor(x, packed, *, max_tm=512):
    """x: (batch, input_size) f32; packed: result of pack_params()."""
    batch, input_size = x.shape
    assert input_size == packed["input_size"]
    num_hidden = packed["num_hidden"]
    output_size = packed["output_size"]
    P_h, P_out = packed["P_h"], packed["P_out"]
    w_in, b_in = packed["w_in"], packed["b_in"]
    w_hid, b_hid = packed["w_hid"], packed["b_hid"]
    w_out, b_out = packed["w_out"], packed["b_out"]

    # Batch tiling: minimise padding, and use >=2 tiles when the batch allows
    # (v7x megacore: "parallel" grid axes are sharded across the 2 TensorCores).
    n_tiles = max(pl.cdiv(batch, max_tm), min(2, pl.cdiv(batch, 8)))
    tm = _round_up(pl.cdiv(batch, n_tiles), 8)
    batch_pad = tm * n_tiles
    grid = (n_tiles,)

    # Pad batch rows only when needed; columns stay at the real input_size
    # (a legal full-extent last dim), avoiding the wide zero-pad copy of x.
    x = x.astype(jnp.float32)
    if batch_pad != batch:
        x_in = jnp.zeros((batch_pad, input_size), dtype=jnp.float32)
        x_in = x_in.at[:batch].set(x)
    else:
        x_in = x

    # Advisory cost estimate (padded dims = actual work performed).
    flops = 2 * batch_pad * (input_size * P_h
                             + num_hidden * P_h * P_h
                             + P_h * P_out)
    param_bytes = sum(int(a.size) * a.dtype.itemsize
                      for a in (w_in, b_in, w_hid, b_hid, w_out, b_out))
    bytes_accessed = (int(x_in.size) * 4 + param_bytes + batch_pad * P_out * 4)
    cost = pl.CostEstimate(flops=int(flops), transcendentals=0,
                           bytes_accessed=int(bytes_accessed))

    # Physical VMEM (fallback to the smallest production value, v7x's 64 MiB).
    try:
        phys_vmem = int(pltpu.get_tpu_info().vmem_capacity_bytes)
    except Exception:
        phys_vmem = 64 << 20

    kernel = functools.partial(_mlp_kernel, num_hidden=num_hidden)
    out_shape = jax.ShapeDtypeStruct((batch_pad, P_out), jnp.float32)

    def build_and_run(buffered_params):
        if buffered_params:
            def param_spec(shape, imap):
                return pl.BlockSpec(shape, imap, pipeline_mode=pl.Buffered(1))
        else:
            def param_spec(shape, imap):
                return pl.BlockSpec(shape, imap)

        in_specs = [
            pl.BlockSpec((tm, input_size), lambda i: (i, 0)),
            param_spec((input_size, P_h), lambda i: (0, 0)),
            param_spec((1, P_h), lambda i: (0, 0)),
            param_spec((num_hidden, P_h, P_h), lambda i: (0, 0, 0)),
            param_spec((num_hidden, 1, P_h), lambda i: (0, 0, 0)),
            param_spec((P_h, P_out), lambda i: (0, 0)),
            param_spec((1, P_out), lambda i: (0, 0)),
        ]
        out_specs = pl.BlockSpec((tm, P_out), lambda i: (i, 0))

        # Exact buffer-count VMEM budget: x/out tiles are double-buffered,
        # params single- (or double-) buffered, plus activation headroom.
        io_bytes = 2 * (tm * input_size * 4 + tm * P_out * 4)
        act_bytes = 4 * tm * P_h * 4
        vmem_needed = io_bytes + act_bytes + \
            (1 if buffered_params else 2) * param_bytes
        vmem_limit = int(min(int(vmem_needed * 1.25) + (2 << 20),
                             int(phys_vmem * 0.8)))
        vmem_limit = max(vmem_limit, 4 << 20)

        return pl.pallas_call(
            kernel,
            out_shape=out_shape,
            grid_spec=pltpu.PrefetchScalarGridSpec(
                num_scalar_prefetch=0,
                grid=grid,
                in_specs=in_specs,
                out_specs=out_specs,
            ),
            compiler_params=pltpu.CompilerParams(
                dimension_semantics=("parallel",),
                vmem_limit_bytes=vmem_limit),
            cost_estimate=cost,
        )(x_in, w_in, b_in, w_hid, b_hid, w_out, b_out)

    try:
        out_p = build_and_run(buffered_params=True)
    except Exception:
        # Older JAX without BlockSpec(pipeline_mode=...): fall back to defaults.
        out_p = build_and_run(buffered_params=False)

    return out_p[:batch, :output_size]


# --------------------------------------------------------------------------- #
# Reference + synthetic parameters
# --------------------------------------------------------------------------- #
def init_params(key, input_size, hidden_size, output_size,
                num_hidden_layers=NUM_HIDDEN_LAYERS):
    """Deterministic synthetic parameters matching nn.Linear init ranges.

    Returned weights are (in_features, out_features), i.e. transposed vs. torch.
    """
    dims = [input_size] + [hidden_size] * (num_hidden_layers + 1) + [output_size]
    weights, biases = [], []
    for k in range(len(dims) - 1):
        key, kw, kb = jax.random.split(key, 3)
        bound = 1.0 / jnp.sqrt(dims[k])
        weights.append(jax.random.uniform(
            kw, (dims[k], dims[k + 1]), minval=-bound, maxval=bound,
            dtype=jnp.float32))
        biases.append(jax.random.uniform(
            kb, (1, dims[k + 1]), minval=-bound, maxval=bound,
            dtype=jnp.float32))
    return weights, biases


def reference_mlp(x, weights, biases):
    h = x
    for w, b in zip(weights[:-1], biases[:-1]):
        h = jnp.maximum(h @ w + b, 0.0)
    return h @ weights[-1] + biases[-1]


# --------------------------------------------------------------------------- #
# Demo / self-test
# --------------------------------------------------------------------------- #
if __name__ == "__main__":
    key = jax.random.PRNGKey(0)
    batch, input_size, hidden_size, output_size = 16, 8, 32, 4

    key, kx = jax.random.split(key)
    x = jax.random.normal(kx, (batch, input_size), dtype=jnp.float32)
    weights, biases = init_params(key, input_size, hidden_size, output_size)
    ref = reference_mlp(x, weights, biases)

    # f32 weights: tight tolerance vs. the pure-JAX reference.
    packed_f32 = pack_params(weights, biases, param_dtype=jnp.float32)
    out = jax.block_until_ready(time_series_predictor(x, packed_f32))
    assert out.shape == (batch, output_size)
    assert jnp.allclose(out, ref, atol=1e-5, rtol=1e-5), "f32 mismatch vs reference"

    # bf16 weights (recommended on v6e/v7x): MXU bf16 inputs, f32 accumulation.
    packed_bf16 = pack_params(weights, biases, param_dtype=jnp.bfloat16)
    out_bf16 = jax.block_until_ready(time_series_predictor(x, packed_bf16))
    assert out_bf16.shape == (batch, output_size)
    assert jnp.allclose(out_bf16, ref, atol=5e-2, rtol=5e-2), "bf16 mismatch vs reference"

    print("KERNEL_OK")
</pallas_src>

<mosaic_0001>
module attributes {stable_mosaic.version = 11 : i64} {
  func.func @_mlp_kernel(%arg0: i32, %arg1: memref<8x8xf32, #tpu.memory_space<vmem>>, %arg2: memref<8x128xf32, #tpu.memory_space<vmem>>, %arg3: memref<1x128xf32, #tpu.memory_space<vmem>>, %arg4: memref<5x128x128xf32, #tpu.memory_space<vmem>>, %arg5: memref<5x1x128xf32, #tpu.memory_space<vmem>>, %arg6: memref<128x128xf32, #tpu.memory_space<vmem>>, %arg7: memref<1x128xf32, #tpu.memory_space<vmem>>, %arg8: memref<8x128xf32, #tpu.memory_space<vmem>>) attributes {dimension_semantics = [#tpu.dimension_semantics<parallel>], iteration_bounds = array<i64: 2>, scalar_prefetch = 0 : i64, scratch_operands = 0 : i64, tpu.core_type = #tpu.core_type<tc>, window_params = [{transform_indices = @transform_0, window_bounds = array<i64: 8, 8>}, {pipeline_mode = #tpu.pipeline_mode<synchronous>, transform_indices = @transform_1, window_bounds = array<i64: 8, 128>}, {pipeline_mode = #tpu.pipeline_mode<synchronous>, transform_indices = @transform_2, window_bounds = array<i64: 1, 128>}, {pipeline_mode = #tpu.pipeline_mode<synchronous>, transform_indices = @transform_3, window_bounds = array<i64: 5, 128, 128>}, {pipeline_mode = #tpu.pipeline_mode<synchronous>, transform_indices = @transform_4, window_bounds = array<i64: 5, 1, 128>}, {pipeline_mode = #tpu.pipeline_mode<synchronous>, transform_indices = @transform_5, window_bounds = array<i64: 128, 128>}, {pipeline_mode = #tpu.pipeline_mode<synchronous>, transform_indices = @transform_6, window_bounds = array<i64: 1, 128>}, {transform_indices = @transform_7, window_bounds = array<i64: 8, 128>}]} {
    %c0 = arith.constant 0 : index
    %c0_0 = arith.constant 0 : index
    %0 = vector.load %arg1[%c0, %c0_0] : memref<8x8xf32, #tpu.memory_space<vmem>>, vector<8x8xf32>
    %c0_1 = arith.constant 0 : index
    %c0_2 = arith.constant 0 : index
    %1 = vector.load %arg2[%c0_1, %c0_2] : memref<8x128xf32, #tpu.memory_space<vmem>>, vector<8x128xf32>
    %cst = arith.constant dense<0.000000e+00> : vector<8x128xf32>
    %2 = tpu.matmul %0, %1, %cst {dimension_numbers = #tpu.dot_dimension_numbers<[1], [0], [0], [1], [0, 0, 1, 1], [], []>} : vector<8x8xf32>, vector<8x128xf32>, vector<8x128xf32> -> vector<8x128xf32>
    %c0_3 = arith.constant 0 : index
    %c0_4 = arith.constant 0 : index
    %3 = vector.load %arg3[%c0_3, %c0_4] : memref<1x128xf32, #tpu.memory_space<vmem>>, vector<1x128xf32>
    %4 = vector.broadcast %3 : vector<1x128xf32> to vector<8x128xf32>
    %5 = arith.addf %2, %4 : vector<8x128xf32>
    %cst_5 = arith.constant 0.000000e+00 : f32
    %6 = vector.broadcast %cst_5 : f32 to vector<8x128xf32>
    %7 = arith.maximumf %5, %6 : vector<8x128xf32>
    %c0_6 = arith.constant 0 : index
    %c0_7 = arith.constant 0 : index
    %c0_8 = arith.constant 0 : index
    %8 = vector.load %arg4[%c0_6, %c0_7, %c0_8] : memref<5x128x128xf32, #tpu.memory_space<vmem>>, vector<1x128x128xf32>
    %9 = vector.shape_cast %8 : vector<1x128x128xf32> to vector<128x128xf32>
    %cst_9 = arith.constant dense<0.000000e+00> : vector<8x128xf32>
    %10 = tpu.matmul %7, %9, %cst_9 {dimension_numbers = #tpu.dot_dimension_numbers<[1], [0], [0], [1], [0, 0, 1, 1], [], []>} : vector<8x128xf32>, vector<128x128xf32>, vector<8x128xf32> -> vector<8x128xf32>
    %c0_10 = arith.constant 0 : index
    %c0_11 = arith.constant 0 : index
    %c0_12 = arith.constant 0 : index
    %11 = vector.load %arg5[%c0_10, %c0_11, %c0_12] : memref<5x1x128xf32, #tpu.memory_space<vmem>>, vector<1x1x128xf32>
    %12 = vector.shape_cast %11 : vector<1x1x128xf32> to vector<1x128xf32>
    %13 = vector.broadcast %12 : vector<1x128xf32> to vector<8x128xf32>
    %14 = arith.addf %10, %13 : vector<8x128xf32>
    %cst_13 = arith.constant 0.000000e+00 : f32
    %15 = vector.broadcast %cst_13 : f32 to vector<8x128xf32>
    %16 = arith.maximumf %14, %15 : vector<8x128xf32>
    %c1 = arith.constant 1 : index
    %c0_14 = arith.constant 0 : index
    %c0_15 = arith.constant 0 : index
    %17 = vector.load %arg4[%c1, %c0_14, %c0_15] : memref<5x128x128xf32, #tpu.memory_space<vmem>>, vector<1x128x128xf32>
    %18 = vector.shape_cast %17 : vector<1x128x128xf32> to vector<128x128xf32>
    %cst_16 = arith.constant dense<0.000000e+00> : vector<8x128xf32>
    %19 = tpu.matmul %16, %18, %cst_16 {dimension_numbers = #tpu.dot_dimension_numbers<[1], [0], [0], [1], [0, 0, 1, 1], [], []>} : vector<8x128xf32>, vector<128x128xf32>, vector<8x128xf32> -> vector<8x128xf32>
    %c1_17 = arith.constant 1 : index
    %c0_18 = arith.constant 0 : index
    %c0_19 = arith.constant 0 : index
    %20 = vector.load %arg5[%c1_17, %c0_18, %c0_19] : memref<5x1x128xf32, #tpu.memory_space<vmem>>, vector<1x1x128xf32>
    %21 = vector.shape_cast %20 : vector<1x1x128xf32> to vector<1x128xf32>
    %22 = vector.broadcast %21 : vector<1x128xf32> to vector<8x128xf32>
    %23 = arith.addf %19, %22 : vector<8x128xf32>
    %cst_20 = arith.constant 0.000000e+00 : f32
    %24 = vector.broadcast %cst_20 : f32 to vector<8x128xf32>
    %25 = arith.maximumf %23, %24 : vector<8x128xf32>
    %c2 = arith.constant 2 : index
    %c0_21 = arith.constant 0 : index
    %c0_22 = arith.constant 0 : index
    %26 = vector.load %arg4[%c2, %c0_21, %c0_22] : memref<5x128x128xf32, #tpu.memory_space<vmem>>, vector<1x128x128xf32>
    %27 = vector.shape_cast %26 : vector<1x128x128xf32> to vector<128x128xf32>
    %cst_23 = arith.constant dense<0.000000e+00> : vector<8x128xf32>
    %28 = tpu.matmul %25, %27, %cst_23 {dimension_numbers = #tpu.dot_dimension_numbers<[1], [0], [0], [1], [0, 0, 1, 1], [], []>} : vector<8x128xf32>, vector<128x128xf32>, vector<8x128xf32> -> vector<8x128xf32>
    %c2_24 = arith.constant 2 : index
    %c0_25 = arith.constant 0 : index
    %c0_26 = arith.constant 0 : index
    %29 = vector.load %arg5[%c2_24, %c0_25, %c0_26] : memref<5x1x128xf32, #tpu.memory_space<vmem>>, vector<1x1x128xf32>
    %30 = vector.shape_cast %29 : vector<1x1x128xf32> to vector<1x128xf32>
    %31 = vector.broadcast %30 : vector<1x128xf32> to vector<8x128xf32>
    %32 = arith.addf %28, %31 : vector<8x128xf32>
    %cst_27 = arith.constant 0.000000e+00 : f32
    %33 = vector.broadcast %cst_27 : f32 to vector<8x128xf32>
    %34 = arith.maximumf %32, %33 : vector<8x128xf32>
    %c3 = arith.constant 3 : index
    %c0_28 = arith.constant 0 : index
    %c0_29 = arith.constant 0 : index
    %35 = vector.load %arg4[%c3, %c0_28, %c0_29] : memref<5x128x128xf32, #tpu.memory_space<vmem>>, vector<1x128x128xf32>
    %36 = vector.shape_cast %35 : vector<1x128x128xf32> to vector<128x128xf32>
    %cst_30 = arith.constant dense<0.000000e+00> : vector<8x128xf32>
    %37 = tpu.matmul %34, %36, %cst_30 {dimension_numbers = #tpu.dot_dimension_numbers<[1], [0], [0], [1], [0, 0, 1, 1], [], []>} : vector<8x128xf32>, vector<128x128xf32>, vector<8x128xf32> -> vector<8x128xf32>
    %c3_31 = arith.constant 3 : index
    %c0_32 = arith.constant 0 : index
    %c0_33 = arith.constant 0 : index
    %38 = vector.load %arg5[%c3_31, %c0_32, %c0_33] : memref<5x1x128xf32, #tpu.memory_space<vmem>>, vector<1x1x128xf32>
    %39 = vector.shape_cast %38 : vector<1x1x128xf32> to vector<1x128xf32>
    %40 = vector.broadcast %39 : vector<1x128xf32> to vector<8x128xf32>
    %41 = arith.addf %37, %40 : vector<8x128xf32>
    %cst_34 = arith.constant 0.000000e+00 : f32
    %42 = vector.broadcast %cst_34 : f32 to vector<8x128xf32>
    %43 = arith.maximumf %41, %42 : vector<8x128xf32>
    %c4 = arith.constant 4 : index
    %c0_35 = arith.constant 0 : index
    %c0_36 = arith.constant 0 : index
    %44 = vector.load %arg4[%c4, %c0_35, %c0_36] : memref<5x128x128xf32, #tpu.memory_space<vmem>>, vector<1x128x128xf32>
    %45 = vector.shape_cast %44 : vector<1x128x128xf32> to vector<128x128xf32>
    %cst_37 = arith.constant dense<0.000000e+00> : vector<8x128xf32>
    %46 = tpu.matmul %43, %45, %cst_37 {dimension_numbers = #tpu.dot_dimension_numbers<[1], [0], [0], [1], [0, 0, 1, 1], [], []>} : vector<8x128xf32>, vector<128x128xf32>, vector<8x128xf32> -> vector<8x128xf32>
    %c4_38 = arith.constant 4 : index
    %c0_39 = arith.constant 0 : index
    %c0_40 = arith.constant 0 : index
    %47 = vector.load %arg5[%c4_38, %c0_39, %c0_40] : memref<5x1x128xf32, #tpu.memory_space<vmem>>, vector<1x1x128xf32>
    %48 = vector.shape_cast %47 : vector<1x1x128xf32> to vector<1x128xf32>
    %49 = vector.broadcast %48 : vector<1x128xf32> to vector<8x128xf32>
    %50 = arith.addf %46, %49 : vector<8x128xf32>
    %cst_41 = arith.constant 0.000000e+00 : f32
    %51 = vector.broadcast %cst_41 : f32 to vector<8x128xf32>
    %52 = arith.maximumf %50, %51 : vector<8x128xf32>
    %c0_42 = arith.constant 0 : index
    %c0_43 = arith.constant 0 : index
    %53 = vector.load %arg6[%c0_42, %c0_43] : memref<128x128xf32, #tpu.memory_space<vmem>>, vector<128x128xf32>
    %cst_44 = arith.constant dense<0.000000e+00> : vector<8x128xf32>
    %54 = tpu.matmul %52, %53, %cst_44 {dimension_numbers = #tpu.dot_dimension_numbers<[1], [0], [0], [1], [0, 0, 1, 1], [], []>} : vector<8x128xf32>, vector<128x128xf32>, vector<8x128xf32> -> vector<8x128xf32>
    %c0_45 = arith.constant 0 : index
    %c0_46 = arith.constant 0 : index
    %55 = vector.load %arg7[%c0_45, %c0_46] : memref<1x128xf32, #tpu.memory_space<vmem>>, vector<1x128xf32>
    %56 = vector.broadcast %55 : vector<1x128xf32> to vector<8x128xf32>
    %57 = arith.addf %54, %56 : vector<8x128xf32>
    %c0_47 = arith.constant 0 : index
    %c0_48 = arith.constant 0 : index
    %58 = vector.load %arg8[%c0_47, %c0_48] : memref<8x128xf32, #tpu.memory_space<vmem>>, vector<8x128xf32>
    tpu.vector_store %arg8[%c0_47, %c0_48], %57 {strides = array<i32>} : memref<8x128xf32, #tpu.memory_space<vmem>>, vector<8x128xf32>,
    return
  }
  func.func @transform_0(%arg0: i32) -> (i32, i32) {
    %c0_i32 = arith.constant 0 : i32
    %c0_i32_0 = arith.constant 0 : i32
    return %arg0, %c0_i32 : i32, i32
  }
  func.func @transform_1(%arg0: i32) -> (i32, i32) {
    %c0_i32 = arith.constant 0 : i32
    %c0_i32_0 = arith.constant 0 : i32
    %c0_i32_1 = arith.constant 0 : i32
    return %c0_i32, %c0_i32_0 : i32, i32
  }
  func.func @transform_2(%arg0: i32) -> (i32, i32) {
    %c0_i32 = arith.constant 0 : i32
    %c0_i32_0 = arith.constant 0 : i32
    %c0_i32_1 = arith.constant 0 : i32
    return %c0_i32, %c0_i32_0 : i32, i32
  }
  func.func @transform_3(%arg0: i32) -> (i32, i32, i32) {
    %c0_i32 = arith.constant 0 : i32
    %c0_i32_0 = arith.constant 0 : i32
    %c0_i32_1 = arith.constant 0 : i32
    %c0_i32_2 = arith.constant 0 : i32
    return %c0_i32, %c0_i32_0, %c0_i32_1 : i32, i32, i32
  }
  func.func @transform_4(%arg0: i32) -> (i32, i32, i32) {
    %c0_i32 = arith.constant 0 : i32
    %c0_i32_0 = arith.constant 0 : i32
    %c0_i32_1 = arith.constant 0 : i32
    %c0_i32_2 = arith.constant 0 : i32
    return %c0_i32, %c0_i32_0, %c0_i32_1 : i32, i32, i32
  }
  func.func @transform_5(%arg0: i32) -> (i32, i32) {
    %c0_i32 = arith.constant 0 : i32
    %c0_i32_0 = arith.constant 0 : i32
    %c0_i32_1 = arith.constant 0 : i32
    return %c0_i32, %c0_i32_0 : i32, i32
  }
  func.func @transform_6(%arg0: i32) -> (i32, i32) {
    %c0_i32 = arith.constant 0 : i32
    %c0_i32_0 = arith.constant 0 : i32
    %c0_i32_1 = arith.constant 0 : i32
    return %c0_i32, %c0_i32_0 : i32, i32
  }
  func.func @transform_7(%arg0: i32) -> (i32, i32) {
    %c0_i32 = arith.constant 0 : i32
    %c0_i32_0 = arith.constant 0 : i32
    return %arg0, %c0_i32 : i32, i32
  }
}

module attributes {stable_mosaic.version = 11 : i64} {
  func.func @_mlp_kernel(%arg0: i32, %arg1: memref<8x8xf32, #tpu.memory_space<vmem>>, %arg2: memref<8x128xf32, #tpu.memory_space<vmem>>, %arg3: memref<1x128xf32, #tpu.memory_space<vmem>>, %arg4: memref<5x128x128xf32, #tpu.memory_space<vmem>>, %arg5: memref<5x1x128xf32, #tpu.memory_space<vmem>>, %arg6: memref<128x128xf32, #tpu.memory_space<vmem>>, %arg7: memref<1x128xf32, #tpu.memory_space<vmem>>, %arg8: memref<8x128xf32, #tpu.memory_space<vmem>>) attributes {dimension_semantics = [#tpu.dimension_semantics<parallel>], iteration_bounds = array<i64: 2>, scalar_prefetch = 0 : i64, scratch_operands = 0 : i64, tpu.core_type = #tpu.core_type<tc>, window_params = [{transform_indices = @transform_0, window_bounds = array<i64: 8, 8>}, {pipeline_mode = #tpu.pipeline_mode<synchronous>, transform_indices = @transform_1, window_bounds = array<i64: 8, 128>}, {pipeline_mode = #tpu.pipeline_mode<synchronous>, transform_indices = @transform_2, window_bounds = array<i64: 1, 128>}, {pipeline_mode = #tpu.pipeline_mode<synchronous>, transform_indices = @transform_3, window_bounds = array<i64: 5, 128, 128>}, {pipeline_mode = #tpu.pipeline_mode<synchronous>, transform_indices = @transform_4, window_bounds = array<i64: 5, 1, 128>}, {pipeline_mode = #tpu.pipeline_mode<synchronous>, transform_indices = @transform_5, window_bounds = array<i64: 128, 128>}, {pipeline_mode = #tpu.pipeline_mode<synchronous>, transform_indices = @transform_6, window_bounds = array<i64: 1, 128>}, {transform_indices = @transform_7, window_bounds = array<i64: 8, 128>}]} {
    %c0 = arith.constant 0 : index
    %c0_0 = arith.constant 0 : index
    %0 = vector.load %arg1[%c0, %c0_0] : memref<8x8xf32, #tpu.memory_space<vmem>>, vector<8x8xf32>
    %c0_1 = arith.constant 0 : index
    %c0_2 = arith.constant 0 : index
    %1 = vector.load %arg2[%c0_1, %c0_2] : memref<8x128xf32, #tpu.memory_space<vmem>>, vector<8x128xf32>
    %cst = arith.constant dense<0.000000e+00> : vector<8x128xf32>
    %2 = tpu.matmul %0, %1, %cst {dimension_numbers = #tpu.dot_dimension_numbers<[1], [0], [0], [1], [0, 0, 1, 1], [], []>} : vector<8x8xf32>, vector<8x128xf32>, vector<8x128xf32> -> vector<8x128xf32>
    %c0_3 = arith.constant 0 : index
    %c0_4 = arith.constant 0 : index
    %3 = vector.load %arg3[%c0_3, %c0_4] : memref<1x128xf32, #tpu.memory_space<vmem>>, vector<1x128xf32>
    %4 = vector.broadcast %3 : vector<1x128xf32> to vector<8x128xf32>
    %5 = arith.addf %2, %4 : vector<8x128xf32>
    %cst_5 = arith.constant 0.000000e+00 : f32
    %6 = vector.broadcast %cst_5 : f32 to vector<8x128xf32>
    %7 = arith.maximumf %5, %6 : vector<8x128xf32>
    %c0_6 = arith.constant 0 : index
    %c0_7 = arith.constant 0 : index
    %c0_8 = arith.constant 0 : index
    %8 = vector.load %arg4[%c0_6, %c0_7, %c0_8] : memref<5x128x128xf32, #tpu.memory_space<vmem>>, vector<1x128x128xf32>
    %9 = vector.shape_cast %8 : vector<1x128x128xf32> to vector<128x128xf32>
    %cst_9 = arith.constant dense<0.000000e+00> : vector<8x128xf32>
    %10 = tpu.matmul %7, %9, %cst_9 {dimension_numbers = #tpu.dot_dimension_numbers<[1], [0], [0], [1], [0, 0, 1, 1], [], []>} : vector<8x128xf32>, vector<128x128xf32>, vector<8x128xf32> -> vector<8x128xf32>
    %c0_10 = arith.constant 0 : index
    %c0_11 = arith.constant 0 : index
    %c0_12 = arith.constant 0 : index
    %11 = vector.load %arg5[%c0_10, %c0_11, %c0_12] : memref<5x1x128xf32, #tpu.memory_space<vmem>>, vector<1x1x128xf32>
    %12 = vector.shape_cast %11 : vector<1x1x128xf32> to vector<1x128xf32>
    %13 = vector.broadcast %12 : vector<1x128xf32> to vector<8x128xf32>
    %14 = arith.addf %10, %13 : vector<8x128xf32>
    %cst_13 = arith.constant 0.000000e+00 : f32
    %15 = vector.broadcast %cst_13 : f32 to vector<8x128xf32>
    %16 = arith.maximumf %14, %15 : vector<8x128xf32>
    %c1 = arith.constant 1 : index
    %c0_14 = arith.constant 0 : index
    %c0_15 = arith.constant 0 : index
    %17 = vector.load %arg4[%c1, %c0_14, %c0_15] : memref<5x128x128xf32, #tpu.memory_space<vmem>>, vector<1x128x128xf32>
    %18 = vector.shape_cast %17 : vector<1x128x128xf32> to vector<128x128xf32>
    %cst_16 = arith.constant dense<0.000000e+00> : vector<8x128xf32>
    %19 = tpu.matmul %16, %18, %cst_16 {dimension_numbers = #tpu.dot_dimension_numbers<[1], [0], [0], [1], [0, 0, 1, 1], [], []>} : vector<8x128xf32>, vector<128x128xf32>, vector<8x128xf32> -> vector<8x128xf32>
    %c1_17 = arith.constant 1 : index
    %c0_18 = arith.constant 0 : index
    %c0_19 = arith.constant 0 : index
    %20 = vector.load %arg5[%c1_17, %c0_18, %c0_19] : memref<5x1x128xf32, #tpu.memory_space<vmem>>, vector<1x1x128xf32>
    %21 = vector.shape_cast %20 : vector<1x1x128xf32> to vector<1x128xf32>
    %22 = vector.broadcast %21 : vector<1x128xf32> to vector<8x128xf32>
    %23 = arith.addf %19, %22 : vector<8x128xf32>
    %cst_20 = arith.constant 0.000000e+00 : f32
    %24 = vector.broadcast %cst_20 : f32 to vector<8x128xf32>
    %25 = arith.maximumf %23, %24 : vector<8x128xf32>
    %c2 = arith.constant 2 : index
    %c0_21 = arith.constant 0 : index
    %c0_22 = arith.constant 0 : index
    %26 = vector.load %arg4[%c2, %c0_21, %c0_22] : memref<5x128x128xf32, #tpu.memory_space<vmem>>, vector<1x128x128xf32>
    %27 = vector.shape_cast %26 : vector<1x128x128xf32> to vector<128x128xf32>
    %cst_23 = arith.constant dense<0.000000e+00> : vector<8x128xf32>
    %28 = tpu.matmul %25, %27, %cst_23 {dimension_numbers = #tpu.dot_dimension_numbers<[1], [0], [0], [1], [0, 0, 1, 1], [], []>} : vector<8x128xf32>, vector<128x128xf32>, vector<8x128xf32> -> vector<8x128xf32>
    %c2_24 = arith.constant 2 : index
    %c0_25 = arith.constant 0 : index
    %c0_26 = arith.constant 0 : index
    %29 = vector.load %arg5[%c2_24, %c0_25, %c0_26] : memref<5x1x128xf32, #tpu.memory_space<vmem>>, vector<1x1x128xf32>
    %30 = vector.shape_cast %29 : vector<1x1x128xf32> to vector<1x128xf32>
    %31 = vector.broadcast %30 : vector<1x128xf32> to vector<8x128xf32>
    %32 = arith.addf %28, %31 : vector<8x128xf32>
    %cst_27 = arith.constant 0.000000e+00 : f32
    %33 = vector.broadcast %cst_27 : f32 to vector<8x128xf32>
    %34 = arith.maximumf %32, %33 : vector<8x128xf32>
    %c3 = arith.constant 3 : index
    %c0_28 = arith.constant 0 : index
    %c0_29 = arith.constant 0 : index
    %35 = vector.load %arg4[%c3, %c0_28, %c0_29] : memref<5x128x128xf32, #tpu.memory_space<vmem>>, vector<1x128x128xf32>
    %36 = vector.shape_cast %35 : vector<1x128x128xf32> to vector<128x128xf32>
    %cst_30 = arith.constant dense<0.000000e+00> : vector<8x128xf32>
    %37 = tpu.matmul %34, %36, %cst_30 {dimension_numbers = #tpu.dot_dimension_numbers<[1], [0], [0], [1], [0, 0, 1, 1], [], []>} : vector<8x128xf32>, vector<128x128xf32>, vector<8x128xf32> -> vector<8x128xf32>
    %c3_31 = arith.constant 3 : index
    %c0_32 = arith.constant 0 : index
    %c0_33 = arith.constant 0 : index
    %38 = vector.load %arg5[%c3_31, %c0_32, %c0_33] : memref<5x1x128xf32, #tpu.memory_space<vmem>>, vector<1x1x128xf32>
    %39 = vector.shape_cast %38 : vector<1x1x128xf32> to vector<1x128xf32>
    %40 = vector.broadcast %39 : vector<1x128xf32> to vector<8x128xf32>
    %41 = arith.addf %37, %40 : vector<8x128xf32>
    %cst_34 = arith.constant 0.000000e+00 : f32
    %42 = vector.broadcast %cst_34 : f32 to vector<8x128xf32>
    %43 = arith.maximumf %41, %42 : vector<8x128xf32>
    %c4 = arith.constant 4 : index
    %c0_35 = arith.constant 0 : index
    %c0_36 = arith.constant 0 : index
    %44 = vector.load %arg4[%c4, %c0_35, %c0_36] : memref<5x128x128xf32, #tpu.memory_space<vmem>>, vector<1x128x128xf32>
    %45 = vector.shape_cast %44 : vector<1x128x128xf32> to vector<128x128xf32>
    %cst_37 = arith.constant dense<0.000000e+00> : vector<8x128xf32>
    %46 = tpu.matmul %43, %45, %cst_37 {dimension_numbers = #tpu.dot_dimension_numbers<[1], [0], [0], [1], [0, 0, 1, 1], [], []>} : vector<8x128xf32>, vector<128x128xf32>, vector<8x128xf32> -> vector<8x128xf32>
    %c4_38 = arith.constant 4 : index
    %c0_39 = arith.constant 0 : index
    %c0_40 = arith.constant 0 : index
    %47 = vector.load %arg5[%c4_38, %c0_39, %c0_40] : memref<5x1x128xf32, #tpu.memory_space<vmem>>, vector<1x1x128xf32>
    %48 = vector.shape_cast %47 : vector<1x1x128xf32> to vector<1x128xf32>
    %49 = vector.broadcast %48 : vector<1x128xf32> to vector<8x128xf32>
    %50 = arith.addf %46, %49 : vector<8x128xf32>
    %cst_41 = arith.constant 0.000000e+00 : f32
    %51 = vector.broadcast %cst_41 : f32 to vector<8x128xf32>
    %52 = arith.maximumf %50, %51 : vector<8x128xf32>
    %c0_42 = arith.constant 0 : index
    %c0_43 = arith.constant 0 : index
    %53 = vector.load %arg6[%c0_42, %c0_43] : memref<128x128xf32, #tpu.memory_space<vmem>>, vector<128x128xf32>
    %cst_44 = arith.constant dense<0.000000e+00> : vector<8x128xf32>
    %54 = tpu.matmul %52, %53, %cst_44 {dimension_numbers = #tpu.dot_dimension_numbers<[1], [0], [0], [1], [0, 0, 1, 1], [], []>} : vector<8x128xf32>, vector<128x128xf32>, vector<8x128xf32> -> vector<8x128xf32>
    %c0_45 = arith.constant 0 : index
    %c0_46 = arith.constant 0 : index
    %55 = vector.load %arg7[%c0_45, %c0_46] : memref<1x128xf32, #tpu.memory_space<vmem>>, vector<1x128xf32>
    %56 = vector.broadcast %55 : vector<1x128xf32> to vector<8x128xf32>
    %57 = arith.addf %54, %56 : vector<8x128xf32>
    %c0_47 = arith.constant 0 : index
    %c0_48 = arith.constant 0 : index
    %58 = vector.load %arg8[%c0_47, %c0_48] : memref<8x128xf32, #tpu.memory_space<vmem>>, vector<8x128xf32>
    tpu.vector_store %arg8[%c0_47, %c0_48], %57 {strides = array<i32>} : memref<8x128xf32, #tpu.memory_space<vmem>>, vector<8x128xf32>,
    return
  }
  func.func @transform_0(%arg0: i32) -> (i32, i32) {
    %c0_i32 = arith.constant 0 : i32
    %c0_i32_0 = arith.constant 0 : i32
    return %arg0, %c0_i32 : i32, i32
  }
  func.func @transform_1(%arg0: i32) -> (i32, i32) {
    %c0_i32 = arith.constant 0 : i32
    %c0_i32_0 = arith.constant 0 : i32
    %c0_i32_1 = arith.constant 0 : i32
    return %c0_i32, %c0_i32_0 : i32, i32
  }
  func.func @transform_2(%arg0: i32) -> (i32, i32) {
    %c0_i32 = arith.constant 0 : i32
    %c0_i32_0 = arith.constant 0 : i32
    %c0_i32_1 = arith.constant 0 : i32
    return %c0_i32, %c0_i32_0 : i32, i32
  }
  func.func @transform_3(%arg0: i32) -> (i32, i32, i32) {
    %c0_i32 = arith.constant 0 : i32
    %c0_i32_0 = arith.constant 0 : i32
    %c0_i32_1 = arith.constant 0 : i32
    %c0_i32_2 = arith.constant 0 : i32
    return %c0_i32, %c0_i32_0, %c0_i32_1 : i32, i32, i32
  }
  func.func @transform_4(%arg0: i32) -> (i32, i32, i32) {
    %c0_i32 = arith.constant 0 : i32
    %c0_i32_0 = arith.constant 0 : i32
    %c0_i32_1 = arith.constant 0 : i32
    %c0_i32_2 = arith.constant 0 : i32
    return %c0_i32, %c0_i32_0, %c0_i32_1 : i32, i32, i32
  }
  func.func @transform_5(%arg0: i32) -> (i32, i32) {
    %c0_i32 = arith.constant 0 : i32
    %c0_i32_0 = arith.constant 0 : i32
    %c0_i32_1 = arith.constant 0 : i32
    return %c0_i32, %c0_i32_0 : i32, i32
  }
  func.func @transform_6(%arg0: i32) -> (i32, i32) {
    %c0_i32 = arith.constant 0 : i32
    %c0_i32_0 = arith.constant 0 : i32
    %c0_i32_1 = arith.constant 0 : i32
    return %c0_i32, %c0_i32_0 : i32, i32
  }
  func.func @transform_7(%arg0: i32) -> (i32, i32) {
    %c0_i32 = arith.constant 0 : i32
    %c0_i32_0 = arith.constant 0 : i32
    return %arg0, %c0_i32 : i32, i32
  }
}

</mosaic_0001>

<llo_original>
// kernel: tpu_custom_call.1
$region0: #{tpu_custom_call.1}
  #allocation0 [shape = 'u32[]', space=smem, size = 0x4, offset = 0x4, fixed_abs, tag = 'smem constant byte address 0x4 - core index']
  #allocation1 [shape = 'u32[72,128]{1,0:T(1,128)}', space=vmem, size = 0x9000, scoped, tag = 'internal scratch']
  %s0 = inlined_call_operand.vmem [shape: f32[16,8], index: 0, kind: input, shape index: {}]
  %s1 = inlined_call_operand.vmem [shape: f32[8,128], index: 1, kind: input, shape index: {}]
  %s2 = inlined_call_operand.vmem [shape: f32[1,128], index: 2, kind: input, shape index: {}]
  %s3 = inlined_call_operand.hbm [shape: f32[5,128,128], index: 3, kind: input, shape index: {}]
  %s4 = inlined_call_operand.vmem [shape: f32[5,1,128], index: 4, kind: input, shape index: {}]
  %s5 = inlined_call_operand.hbm [shape: f32[128,128], index: 5, kind: input, shape index: {}]
  %s6 = inlined_call_operand.vmem [shape: f32[1,128], index: 6, kind: input, shape index: {}]
  %s7 = inlined_call_operand.hbm [shape: f32[16,128], index: 7, kind: output, shape index: {}]
  %s8 = sld [smem:[#allocation0]]
  $region69: #{tpu_custom_call.1} parent=0
    _
  %s10 = ssub.s32 1, %s8
  %s11 = scalar_select 0, %s10, %s8
  $region1: #{tpu_custom_call.1} parent=0
    #allocation2 [shape = 'u8[327680]{0}', space=vmem, size = 0x50000, scoped, tag = 'input window, operand 3, single buffered']
    #allocation3 [shape = 's32[2]{0}', space=sflag, size = 0x8, scoped, tag = 'scoped memory for tpu_custom_call.1']
    #allocation4 [shape = 's32[2]{0}', space=sflag, size = 0x8, scoped, tag = 'scoped memory for tpu_custom_call.1']
    #allocation5 [shape = 'u8[65536]{0}', space=vmem, size = 0x10000, scoped, tag = 'input window, operand 5, single buffered']
    #allocation6 [shape = 's32[1]{0}', space=sflag, size = 0x4, scoped, tag = 'scoped memory for tpu_custom_call.1']
    #allocation7 [shape = 'u8[8192]{0}', space=vmem, size = 0x2000, scoped, tag = 'output window, operand 0']
    %12 = vsyncpa [#allocation3], 0
    %13 = vsyncpa [#allocation6], 0
    %14 = vsyncpa [#allocation4], 0
    %s15 = scalar_lea.sflag [#allocation4], 1
    %16 = vsyncpa %s15, 0
    loop: start=0, step=1, limit=4
    $region2: #{tpu_custom_call.1} parent=1 // loop_pre_header
      _
    $region3: #{tpu_custom_call.1} parent=1 // loop_header
      %s18 = sphi 0, %s22
      %p19 = scmp.ge.s32.totalorder %s18, 4
      %s28 = sphi 0, %s30
      %s31 = sphi 0, %s28
      %s32 = sphi 0, %s31
      %s48 = sphi 0, %s32
      %s52 = sphi 0, %s52
      %s54 = sphi 0, %s52
      %s55 = sphi 0, %s54
      %s69 = sphi 0, %s55
      %s73 = sphi 0, %s73
      %s75 = sphi 0, %s73
      %s76 = sphi 0, %s75
      %s90 = sphi 0, %s76
      %s94 = sphi 0, %s94
      %s96 = sphi 0, %s94
      %s97 = sphi 0, %s96
      %s111 = sphi 0, %s97
      %s115 = sphi 0, %s115
      %s117 = sphi 0, %s115
      %s118 = sphi 0, %s117
      %s132 = sphi 0, %s118
      %s136 = sphi 0, %s136
      %s138 = sphi 0, %s136
      %s139 = sphi 0, %s138
      %s153 = sphi 0, %s139
      %s157 = sphi 0, %s157
      %s159 = sphi 0, %s157
      %s160 = sphi 0, %s159
      %s174 = sphi 0, %s160
      %s180 = sphi 0, %s182
      %s183 = sphi 0, %s180
      %s184 = sphi 0, %s183
      %s200 = sphi 0, %s184
    $region4: #{tpu_custom_call.1} parent=1 // loop_header_branch
      %21 = sbr.rel (%p19) target = $region8
    $region5: #{tpu_custom_call.1} parent=1 // loop_body
      %s23 = ssub.s32 %s18, 1
      %s24 = ssub.s32 %s18, 2
      %s25 = sadd.s32 %s18, 1
      %s26 = ssub.s32 %s18, %s25
      %p27 = scmp.eq.s32.totalorder %s26, 0
      %s29 = sadd.s32 %s28, 1
      %s30 = scalar_select %p27, %s28, %s29
      %p33 = pneg %p27
      %p34 = scmp.eq.s32.totalorder %s18, 1
      %p35 = por %p33, %p34
      %p36 = scmp.ne.s32.totalorder %s28, %s31
      %p37 = scmp.eq.s32.totalorder %s18, 0
      %p38 = por %p36, %p37
      %p39 = scmp.ne.s32.totalorder %s28, %s31
      %p40 = scmp.eq.s32.totalorder %s23, 1
      %p41 = por %p39, %p40
      %p42 = scmp.ne.s32.totalorder %s31, %s32
      %p43 = scmp.eq.s32.totalorder %s23, 0
      %p44 = por %p42, %p43
      %p45 = scmp.ne.s32.totalorder %s31, %s32
      %p46 = scmp.eq.s32.totalorder %s24, 1
      %p47 = por %p45, %p46
      %p49 = scmp.ne.s32.totalorder %s32, %s48
      %p50 = scmp.eq.s32.totalorder %s24, 0
      %p51 = por %p49, %p50
      %s53 = sadd.s32 %s52, 1
      %p56 = scmp.eq.s32.totalorder %s18, 1
      %p57 = scmp.ne.s32.totalorder %s52, %s54
      %p58 = scmp.eq.s32.totalorder %s18, 0
      %p59 = por %p57, %p58
      %p60 = scmp.ne.s32.totalorder %s52, %s54
      %p61 = scmp.eq.s32.totalorder %s23, 1
      %p62 = por %p60, %p61
      %p63 = scmp.ne.s32.totalorder %s54, %s55
      %p64 = scmp.eq.s32.totalorder %s23, 0
      %p65 = por %p63, %p64
      %p66 = scmp.ne.s32.totalorder %s54, %s55
      %p67 = scmp.eq.s32.totalorder %s24, 1
      %p68 = por %p66, %p67
      %p70 = scmp.ne.s32.totalorder %s55, %s69
      %p71 = scmp.eq.s32.totalorder %s24, 0
      %p72 = por %p70, %p71
      %s74 = sadd.s32 %s73, 1
      %p77 = scmp.eq.s32.totalorder %s18, 1
      %p78 = scmp.ne.s32.totalorder %s73, %s75
      %p79 = scmp.eq.s32.totalorder %s18, 0
      %p80 = por %p78, %p79
      %p81 = scmp.ne.s32.totalorder %s73, %s75
      %p82 = scmp.eq.s32.totalorder %s23, 1
      %p83 = por %p81, %p82
      %p84 = scmp.ne.s32.totalorder %s75, %s76
      %p85 = scmp.eq.s32.totalorder %s23, 0
      %p86 = por %p84, %p85
      %p87 = scmp.ne.s32.totalorder %s75, %s76
      %p88 = scmp.eq.s32.totalorder %s24, 1
      %p89 = por %p87, %p88
      %p91 = scmp.ne.s32.totalorder %s76, %s90
      %p92 = scmp.eq.s32.totalorder %s24, 0
      %p93 = por %p91, %p92
      %s95 = sadd.s32 %s94, 1
      %p98 = scmp.eq.s32.totalorder %s18, 1
      %p99 = scmp.ne.s32.totalorder %s94, %s96
      %p100 = scmp.eq.s32.totalorder %s18, 0
      %p101 = por %p99, %p100
      %p102 = scmp.ne.s32.totalorder %s94, %s96
      %p103 = scmp.eq.s32.totalorder %s23, 1
      %p104 = por %p102, %p103
      %p105 = scmp.ne.s32.totalorder %s96, %s97
      %p106 = scmp.eq.s32.totalorder %s23, 0
      %p107 = por %p105, %p106
      %p108 = scmp.ne.s32.totalorder %s96, %s97
      %p109 = scmp.eq.s32.totalorder %s24, 1
      %p110 = por %p108, %p109
      %p112 = scmp.ne.s32.totalorder %s97, %s111
      %p113 = scmp.eq.s32.totalorder %s24, 0
      %p114 = por %p112, %p113
      %s116 = sadd.s32 %s115, 1
      %p119 = scmp.eq.s32.totalorder %s18, 1
      %p120 = scmp.ne.s32.totalorder %s115, %s117
      %p121 = scmp.eq.s32.totalorder %s18, 0
      %p122 = por %p120, %p121
      %p123 = scmp.ne.s32.totalorder %s115, %s117
      %p124 = scmp.eq.s32.totalorder %s23, 1
      %p125 = por %p123, %p124
      %p126 = scmp.ne.s32.totalorder %s117, %s118
      %p127 = scmp.eq.s32.totalorder %s23, 0
      %p128 = por %p126, %p127
      %p129 = scmp.ne.s32.totalorder %s117, %s118
      %p130 = scmp.eq.s32.totalorder %s24, 1
      %p131 = por %p129, %p130
      %p133 = scmp.ne.s32.totalorder %s118, %s132
      %p134 = scmp.eq.s32.totalorder %s24, 0
      %p135 = por %p133, %p134
      %s137 = sadd.s32 %s136, 1
      %p140 = scmp.eq.s32.totalorder %s18, 1
      %p141 = scmp.ne.s32.totalorder %s136, %s138
      %p142 = scmp.eq.s32.totalorder %s18, 0
      %p143 = por %p141, %p142
      %p144 = scmp.ne.s32.totalorder %s136, %s138
      %p145 = scmp.eq.s32.totalorder %s23, 1
      %p146 = por %p144, %p145
      %p147 = scmp.ne.s32.totalorder %s138, %s139
      %p148 = scmp.eq.s32.totalorder %s23, 0
      %p149 = por %p147, %p148
      %p150 = scmp.ne.s32.totalorder %s138, %s139
      %p151 = scmp.eq.s32.totalorder %s24, 1
      %p152 = por %p150, %p151
      %p154 = scmp.ne.s32.totalorder %s139, %s153
      %p155 = scmp.eq.s32.totalorder %s24, 0
      %p156 = por %p154, %p155
      %s158 = sadd.s32 %s157, 1
      %p161 = scmp.eq.s32.totalorder %s18, 1
      %p162 = scmp.ne.s32.totalorder %s157, %s159
      %p163 = scmp.eq.s32.totalorder %s18, 0
      %p164 = por %p162, %p163
      %p165 = scmp.ne.s32.totalorder %s157, %s159
      %p166 = scmp.eq.s32.totalorder %s23, 1
      %p167 = por %p165, %p166
      %p168 = scmp.ne.s32.totalorder %s159, %s160
      %p169 = scmp.eq.s32.totalorder %s23, 0
      %p170 = por %p168, %p169
      %p171 = scmp.ne.s32.totalorder %s159, %s160
      %p172 = scmp.eq.s32.totalorder %s24, 1
      %p173 = por %p171, %p172
      %p175 = scmp.ne.s32.totalorder %s160, %s174
      %p176 = scmp.eq.s32.totalorder %s24, 0
      %p177 = por %p175, %p176
      %s178 = ssub.s32 %s18, %s25
      %p179 = scmp.eq.s32.totalorder %s178, 0
      %s181 = sadd.s32 %s180, 1
      %s182 = scalar_select %p179, %s180, %s181
      %p185 = pneg %p179
      %p186 = scmp.eq.s32.totalorder %s18, 1
      %p187 = por %p185, %p186
      %p188 = scmp.ne.s32.totalorder %s180, %s183
      %p189 = scmp.eq.s32.totalorder %s18, 0
      %p190 = por %p188, %p189
      %p191 = scmp.ne.s32.totalorder %s180, %s183
      %p192 = scmp.eq.s32.totalorder %s23, 1
      %p193 = por %p191, %p192
      %p194 = scmp.ne.s32.totalorder %s183, %s184
      %p195 = scmp.eq.s32.totalorder %s23, 0
      %p196 = por %p194, %p195
      %p197 = scmp.ne.s32.totalorder %s183, %s184
      %p198 = scmp.eq.s32.totalorder %s24, 1
      %p199 = por %p197, %p198
      %p201 = scmp.ne.s32.totalorder %s184, %s200
      %p202 = scmp.eq.s32.totalorder %s24, 0
      %p203 = por %p201, %p202
      %p204 = scmp.le.s32.totalorder 1, %s18
      %p205 = scmp.lt.s32.totalorder %s18, 3
      %p206 = pnand %p204, %p205
      %p207 = pneg %p206
      // Predicated region
      $region9: #{tpu_custom_call.1} parent=5 // pred_check
        _
      $region10: #{tpu_custom_call.1} parent=5 // pred_check_branch
        %209 = sbr.rel (%p206) target = $region12
      $region11: #{tpu_custom_call.1} parent=5 // pred_region
        %s210 = ssub.s32 %s18, 1
        // Predicated region
        $region13: #{tpu_custom_call.1} parent=11 // pred_check
          %p211 = pneg %p65
        $region14: #{tpu_custom_call.1} parent=11 // pred_check_branch
          %213 = sbr.rel (%p211) target = $region16
        $region15: #{tpu_custom_call.1} parent=11 // pred_region
          _
        $region16: #{tpu_custom_call.1} parent=11 // pred_fallthru
          _
        // Predicated region
        $region17: #{tpu_custom_call.1} parent=11 // pred_check
          %p214 = pneg %p86
        $region18: #{tpu_custom_call.1} parent=11 // pred_check_branch
          %216 = sbr.rel (%p214) target = $region20
        $region19: #{tpu_custom_call.1} parent=11 // pred_region
          _
        $region20: #{tpu_custom_call.1} parent=11 // pred_fallthru
          _
        // Predicated region
        $region21: #{tpu_custom_call.1} parent=11 // pred_check
          %p217 = pneg %p107
        $region22: #{tpu_custom_call.1} parent=11 // pred_check_branch
          %219 = sbr.rel (%p217) target = $region24
        $region23: #{tpu_custom_call.1} parent=11 // pred_region
          %221 = vsyncadd [#allocation3], 0
          %s222 = sshll.u32 %s3, 4
          %s223 = int_to_ptr.hbm [resolvable:$true] %s222
          %s224 = sshll.u32 [#allocation2], 4
          %s225 = int_to_ptr.vmem [resolvable:$true] %s224
          %230 = dma.hbm_to_vmem [thread:$0]  %s223, 10240, %s225, [#allocation3], 128, 128, 8
        $region24: #{tpu_custom_call.1} parent=11 // pred_fallthru
          _
        // Predicated region
        $region25: #{tpu_custom_call.1} parent=11 // pred_check
          %p231 = pneg %p128
        $region26: #{tpu_custom_call.1} parent=11 // pred_check_branch
          %233 = sbr.rel (%p231) target = $region28
        $region27: #{tpu_custom_call.1} parent=11 // pred_region
          _
        $region28: #{tpu_custom_call.1} parent=11 // pred_fallthru
          _
        // Predicated region
        $region29: #{tpu_custom_call.1} parent=11 // pred_check
          %p234 = pneg %p149
        $region30: #{tpu_custom_call.1} parent=11 // pred_check_branch
          %236 = sbr.rel (%p234) target = $region32
        $region31: #{tpu_custom_call.1} parent=11 // pred_region
          %238 = vsyncadd [#allocation6], 0
          %s239 = sshll.u32 %s5, 4
          %s240 = int_to_ptr.hbm [resolvable:$true] %s239
          %s241 = sshll.u32 [#allocation5], 4
          %s242 = int_to_ptr.vmem [resolvable:$true] %s241
          %247 = dma.hbm_to_vmem [thread:$0]  %s240, 2048, %s242, [#allocation6], 128, 128, 8
        $region32: #{tpu_custom_call.1} parent=11 // pred_fallthru
          _
        // Predicated region
        $region33: #{tpu_custom_call.1} parent=11 // pred_check
          %p248 = pneg %p170
        $region34: #{tpu_custom_call.1} parent=11 // pred_check_branch
          %250 = sbr.rel (%p248) target = $region36
        $region35: #{tpu_custom_call.1} parent=11 // pred_region
          _
        $region36: #{tpu_custom_call.1} parent=11 // pred_fallthru
          _
      $region12: #{tpu_custom_call.1} parent=5 // pred_fallthru
        _
      %p251 = scmp.lt.s32.totalorder %s18, 2
      // Predicated region
      $region37: #{tpu_custom_call.1} parent=5 // pred_check
        %p252 = pneg %p251
      $region38: #{tpu_custom_call.1} parent=5 // pred_check_branch
        %254 = sbr.rel (%p252) target = $region40
      $region39: #{tpu_custom_call.1} parent=5 // pred_region
        // Predicated region
        $region41: #{tpu_custom_call.1} parent=39 // pred_check
          %p255 = pneg %p38
        $region42: #{tpu_custom_call.1} parent=39 // pred_check_branch
          %257 = sbr.rel (%p255) target = $region44
        $region43: #{tpu_custom_call.1} parent=39 // pred_region
          %p258 = scmp.lt.s32.totalorder %s18, 1
          %s259 = scalar_select %p258, %s18, 1
          %s260 = smul.addr %s259, 8
          %s261 = scalar_lea.vmem %s0, %s260
        $region44: #{tpu_custom_call.1} parent=39 // pred_fallthru
          _
      $region40: #{tpu_custom_call.1} parent=5 // pred_fallthru
        _
      %p262 = scmp.le.s32.totalorder 1, %s18
      %p263 = scmp.lt.s32.totalorder %s18, 3
      %p264 = pnand %p262, %p263
      %p265 = pneg %p264
      // Predicated region
      $region45: #{tpu_custom_call.1} parent=5 // pred_check
        _
      $region46: #{tpu_custom_call.1} parent=5 // pred_check_branch
        %267 = sbr.rel (%p264) target = $region48
      $region47: #{tpu_custom_call.1} parent=5 // pred_region
        %s268 = ssub.s32 %s18, 1
        // Predicated region
        $region49: #{tpu_custom_call.1} parent=47 // pred_check
          %p269 = pneg %p107
        $region50: #{tpu_custom_call.1} parent=47 // pred_check_branch
          %271 = sbr.rel (%p269) target = $region52
        $region51: #{tpu_custom_call.1} parent=47 // pred_region
          %273 = dma.done [#allocation3], 10240
        $region52: #{tpu_custom_call.1} parent=47 // pred_fallthru
          _
        // Predicated region
        $region53: #{tpu_custom_call.1} parent=47 // pred_check
          %p274 = pneg %p149
        $region54: #{tpu_custom_call.1} parent=47 // pred_check_branch
          %276 = sbr.rel (%p274) target = $region56
        $region55: #{tpu_custom_call.1} parent=47 // pred_region
          %278 = dma.done [#allocation6], 2048
        $region56: #{tpu_custom_call.1} parent=47 // pred_fallthru
          _
        %p279 = scmp.lt.s32.totalorder %s23, 1
        %s280 = scalar_select %p279, %s23, 1
        %s281 = smul.addr %s280, 8
        %s282 = scalar_lea.vmem %s0, %s281
        %p283 = pneg %p44
        %p284 = pneg %p41
        %p285 = pneg %p65
        %p286 = pneg %p62
        %p287 = pneg %p86
        %p288 = pneg %p83
        %p289 = pneg %p107
        %p290 = pneg %p104
        %p291 = pneg %p128
        %p292 = pneg %p125
        %p293 = pneg %p149
        %p294 = pneg %p146
        %p295 = pneg %p170
        %p296 = pneg %p167
        %p297 = pneg %p196
        %p298 = pneg %p193
        %s299 = sand.u32 %s183, 1
        %s300 = scalar_lea.sflag [#allocation4], %s299
        %s301 = sand.u32 %s183, 1
        %s302 = smul.addr %s301, 8
        %s303 = scalar_lea.vmem [#allocation7], %s302
        %p304 = scmp.lt.s32.totalorder %s23, 1
        %s305 = scalar_select %p304, %s23, 1
        %s306 = smul.addr %s305, 8
        %s307 = scalar_lea.vmem %s0, %s306
        %v308 = vld [vmem:[%s307] sm:$0xff]
        %v309 = vld [vmem:[%s1] sm:$0xff]
        %v310 = vld [vmem:[%s2] sm:$0x1]
        %v312 = vperm.slane %v310, 0
        %vm314 = vcmask 64512
        %v316 = vsel %vm314, %v308, 0
        %318 = vmatpush.msra.mxu0 0.0
        %319 = vmatpush.msra.mxu0 0.0
        %320 = vmatpush.msra.mxu0 0.0
        %321 = vmatpush.msra.mxu0 0.0
        %322 = vmatpush.msra.mxu0 0.0
        %323 = vmatpush.msra.mxu0 0.0
        %324 = vmatpush.msra.mxu0 0.0
        %325 = vmatpush.msra.mxu0 0.0
        %326 = vmatpush.msra.mxu0 0.0
        %327 = vmatpush.msra.mxu0 0.0
        %328 = vmatpush.msra.mxu0 0.0
        %329 = vmatpush.msra.mxu0 0.0
        %330 = vmatpush.msra.mxu0 0.0
        %331 = vmatpush.msra.mxu0 0.0
        %332 = vmatpush.msra.mxu0 0.0
        %333 = vmatpush.msra.mxu0 %v309
        %334 = vmatmul.f32.gmra.mxu0 %v316
        %v335 = vpop.f32.mrf.mxu0
        %v336 = vadd.f32 %v312, %v335
        %337 = vdwg.mxu0
        %v338 = vmax.f32 %v336, 0.0
        %v339 = vld [vmem:[#allocation2] sm:$0xff]
        %v340 = vld [vmem:[#allocation2 + $0x8] sm:$0xff]
        %v341 = vld [vmem:[#allocation2 + $0x10] sm:$0xff]
        %v342 = vld [vmem:[#allocation2 + $0x18] sm:$0xff]
        %v343 = vld [vmem:[#allocation2 + $0x20] sm:$0xff]
        %v344 = vld [vmem:[#allocation2 + $0x28] sm:$0xff]
        %v345 = vld [vmem:[#allocation2 + $0x30] sm:$0xff]
        %v346 = vld [vmem:[#allocation2 + $0x38] sm:$0xff]
        %v347 = vld [vmem:[#allocation2 + $0x40] sm:$0xff]
        %v348 = vld [vmem:[#allocation2 + $0x48] sm:$0xff]
        %v349 = vld [vmem:[#allocation2 + $0x50] sm:$0xff]
        %v350 = vld [vmem:[#allocation2 + $0x58] sm:$0xff]
        %v351 = vld [vmem:[#allocation2 + $0x60] sm:$0xff]
        %v352 = vld [vmem:[#allocation2 + $0x68] sm:$0xff]
        %v353 = vld [vmem:[#allocation2 + $0x70] sm:$0xff]
        %v354 = vld [vmem:[#allocation2 + $0x78] sm:$0xff]
        %v355 = vld [vmem:[%s4] sm:$0x1]
        %v357 = vperm.slane %v355, 0
        %359 = vmatpush.msra.mxu0 %v354
        %360 = vmatpush.msra.mxu0 %v353
        %361 = vmatpush.msra.mxu0 %v352
        %362 = vmatpush.msra.mxu0 %v351
        %363 = vmatpush.msra.mxu0 %v350
        %364 = vmatpush.msra.mxu0 %v349
        %365 = vmatpush.msra.mxu0 %v348
        %366 = vmatpush.msra.mxu0 %v347
        %367 = vmatpush.msra.mxu0 %v346
        %368 = vmatpush.msra.mxu0 %v345
        %369 = vmatpush.msra.mxu0 %v344
        %370 = vmatpush.msra.mxu0 %v343
        %371 = vmatpush.msra.mxu0 %v342
        %372 = vmatpush.msra.mxu0 %v341
        %373 = vmatpush.msra.mxu0 %v340
        %374 = vmatpush.msra.mxu0 %v339
        %375 = vmatmul.f32.gmra.mxu0 %v338
        %v376 = vpop.f32.mrf.mxu0
        %v377 = vadd.f32 %v357, %v376
        %378 = vdwg.mxu0
        %v379 = vmax.f32 %v377, 0.0
        %s380 = scalar_lea.vmem [#allocation2], 128
        %v381 = vld [vmem:[%s380] sm:$0xff]
        %v382 = vld [vmem:[%s380 + $0x8] sm:$0xff]
        %v383 = vld [vmem:[%s380 + $0x10] sm:$0xff]
        %v384 = vld [vmem:[%s380 + $0x18] sm:$0xff]
        %v385 = vld [vmem:[%s380 + $0x20] sm:$0xff]
        %v386 = vld [vmem:[%s380 + $0x28] sm:$0xff]
        %v387 = vld [vmem:[%s380 + $0x30] sm:$0xff]
        %v388 = vld [vmem:[%s380 + $0x38] sm:$0xff]
        %v389 = vld [vmem:[%s380 + $0x40] sm:$0xff]
        %v390 = vld [vmem:[%s380 + $0x48] sm:$0xff]
        %v391 = vld [vmem:[%s380 + $0x50] sm:$0xff]
        %v392 = vld [vmem:[%s380 + $0x58] sm:$0xff]
        %v393 = vld [vmem:[%s380 + $0x60] sm:$0xff]
        %v394 = vld [vmem:[%s380 + $0x68] sm:$0xff]
        %v395 = vld [vmem:[%s380 + $0x70] sm:$0xff]
        %v396 = vld [vmem:[%s380 + $0x78] sm:$0xff]
        %s397 = scalar_lea.vmem %s4, 1
        %v398 = vld [vmem:[%s397] sm:$0x1]
        %v400 = vperm.slane %v398, 0
        %402 = vmatpush.msra.mxu0 %v396
        %403 = vmatpush.msra.mxu0 %v395
        %404 = vmatpush.msra.mxu0 %v394
        %405 = vmatpush.msra.mxu0 %v393
        %406 = vmatpush.msra.mxu0 %v392
        %407 = vmatpush.msra.mxu0 %v391
        %408 = vmatpush.msra.mxu0 %v390
        %409 = vmatpush.msra.mxu0 %v389
        %410 = vmatpush.msra.mxu0 %v388
        %411 = vmatpush.msra.mxu0 %v387
        %412 = vmatpush.msra.mxu0 %v386
        %413 = vmatpush.msra.mxu0 %v385
        %414 = vmatpush.msra.mxu0 %v384
        %415 = vmatpush.msra.mxu0 %v383
        %416 = vmatpush.msra.mxu0 %v382
        %417 = vmatpush.msra.mxu0 %v381
        %418 = vmatmul.f32.gmra.mxu0 %v379
        %v419 = vpop.f32.mrf.mxu0
        %v420 = vadd.f32 %v400, %v419
        %421 = vdwg.mxu0
        %v422 = vmax.f32 %v420, 0.0
        %s423 = scalar_lea.vmem [#allocation2], 256
        %v424 = vld [vmem:[%s423] sm:$0xff]
        %v425 = vld [vmem:[%s423 + $0x8] sm:$0xff]
        %v426 = vld [vmem:[%s423 + $0x10] sm:$0xff]
        %v427 = vld [vmem:[%s423 + $0x18] sm:$0xff]
        %v428 = vld [vmem:[%s423 + $0x20] sm:$0xff]
        %v429 = vld [vmem:[%s423 + $0x28] sm:$0xff]
        %v430 = vld [vmem:[%s423 + $0x30] sm:$0xff]
        %v431 = vld [vmem:[%s423 + $0x38] sm:$0xff]
        %v432 = vld [vmem:[%s423 + $0x40] sm:$0xff]
        %v433 = vld [vmem:[%s423 + $0x48] sm:$0xff]
        %v434 = vld [vmem:[%s423 + $0x50] sm:$0xff]
        %v435 = vld [vmem:[%s423 + $0x58] sm:$0xff]
        %v436 = vld [vmem:[%s423 + $0x60] sm:$0xff]
        %v437 = vld [vmem:[%s423 + $0x68] sm:$0xff]
        %v438 = vld [vmem:[%s423 + $0x70] sm:$0xff]
        %v439 = vld [vmem:[%s423 + $0x78] sm:$0xff]
        %s440 = scalar_lea.vmem %s4, 2
        %v441 = vld [vmem:[%s440] sm:$0x1]
        %v443 = vperm.slane %v441, 0
        %445 = vmatpush.msra.mxu0 %v439
        %446 = vmatpush.msra.mxu0 %v438
        %447 = vmatpush.msra.mxu0 %v437
        %448 = vmatpush.msra.mxu0 %v436
        %449 = vmatpush.msra.mxu0 %v435
        %450 = vmatpush.msra.mxu0 %v434
        %451 = vmatpush.msra.mxu0 %v433
        %452 = vmatpush.msra.mxu0 %v432
        %453 = vmatpush.msra.mxu0 %v431
        %454 = vmatpush.msra.mxu0 %v430
        %455 = vmatpush.msra.mxu0 %v429
        %456 = vmatpush.msra.mxu0 %v428
        %457 = vmatpush.msra.mxu0 %v427
        %458 = vmatpush.msra.mxu0 %v426
        %459 = vmatpush.msra.mxu0 %v425
        %460 = vmatpush.msra.mxu0 %v424
        %461 = vmatmul.f32.gmra.mxu0 %v422
        %v462 = vpop.f32.mrf.mxu0
        %v463 = vadd.f32 %v443, %v462
        %464 = vdwg.mxu0
        %v465 = vmax.f32 %v463, 0.0
        %s466 = scalar_lea.vmem [#allocation2], 384
        %v467 = vld [vmem:[%s466] sm:$0xff]
        %v468 = vld [vmem:[%s466 + $0x8] sm:$0xff]
        %v469 = vld [vmem:[%s466 + $0x10] sm:$0xff]
        %v470 = vld [vmem:[%s466 + $0x18] sm:$0xff]
        %v471 = vld [vmem:[%s466 + $0x20] sm:$0xff]
        %v472 = vld [vmem:[%s466 + $0x28] sm:$0xff]
        %v473 = vld [vmem:[%s466 + $0x30] sm:$0xff]
        %v474 = vld [vmem:[%s466 + $0x38] sm:$0xff]
        %v475 = vld [vmem:[%s466 + $0x40] sm:$0xff]
        %v476 = vld [vmem:[%s466 + $0x48] sm:$0xff]
        %v477 = vld [vmem:[%s466 + $0x50] sm:$0xff]
        %v478 = vld [vmem:[%s466 + $0x58] sm:$0xff]
        %v479 = vld [vmem:[%s466 + $0x60] sm:$0xff]
        %v480 = vld [vmem:[%s466 + $0x68] sm:$0xff]
        %v481 = vld [vmem:[%s466 + $0x70] sm:$0xff]
        %v482 = vld [vmem:[%s466 + $0x78] sm:$0xff]
        %s483 = scalar_lea.vmem %s4, 3
        %v484 = vld [vmem:[%s483] sm:$0x1]
        %v486 = vperm.slane %v484, 0
        %488 = vmatpush.msra.mxu0 %v482
        %489 = vmatpush.msra.mxu0 %v481
        %490 = vmatpush.msra.mxu0 %v480
        %491 = vmatpush.msra.mxu0 %v479
        %492 = vmatpush.msra.mxu0 %v478
        %493 = vmatpush.msra.mxu0 %v477
        %494 = vmatpush.msra.mxu0 %v476
        %495 = vmatpush.msra.mxu0 %v475
        %496 = vmatpush.msra.mxu0 %v474
        %497 = vmatpush.msra.mxu0 %v473
        %498 = vmatpush.msra.mxu0 %v472
        %499 = vmatpush.msra.mxu0 %v471
        %500 = vmatpush.msra.mxu0 %v470
        %501 = vmatpush.msra.mxu0 %v469
        %502 = vmatpush.msra.mxu0 %v468
        %503 = vmatpush.msra.mxu0 %v467
        %504 = vmatmul.f32.gmra.mxu0 %v465
        %v505 = vpop.f32.mrf.mxu0
        %v506 = vadd.f32 %v486, %v505
        %507 = vdwg.mxu0
        %v508 = vmax.f32 %v506, 0.0
        %s509 = scalar_lea.vmem [#allocation2], 512
        %v510 = vld [vmem:[%s509] sm:$0xff]
        %v511 = vld [vmem:[%s509 + $0x8] sm:$0xff]
        %v512 = vld [vmem:[%s509 + $0x10] sm:$0xff]
        %v513 = vld [vmem:[%s509 + $0x18] sm:$0xff]
        %v514 = vld [vmem:[%s509 + $0x20] sm:$0xff]
        %v515 = vld [vmem:[%s509 + $0x28] sm:$0xff]
        %v516 = vld [vmem:[%s509 + $0x30] sm:$0xff]
        %v517 = vld [vmem:[%s509 + $0x38] sm:$0xff]
        %v518 = vld [vmem:[%s509 + $0x40] sm:$0xff]
        %v519 = vld [vmem:[%s509 + $0x48] sm:$0xff]
        %v520 = vld [vmem:[%s509 + $0x50] sm:$0xff]
        %v521 = vld [vmem:[%s509 + $0x58] sm:$0xff]
        %v522 = vld [vmem:[%s509 + $0x60] sm:$0xff]
        %v523 = vld [vmem:[%s509 + $0x68] sm:$0xff]
        %v524 = vld [vmem:[%s509 + $0x70] sm:$0xff]
        %v525 = vld [vmem:[%s509 + $0x78] sm:$0xff]
        %s526 = scalar_lea.vmem %s4, 4
        %v527 = vld [vmem:[%s526] sm:$0x1]
        %v529 = vperm.slane %v527, 0
        %531 = vmatpush.msra.mxu0 %v525
        %532 = vmatpush.msra.mxu0 %v524
        %533 = vmatpush.msra.mxu0 %v523
        %534 = vmatpush.msra.mxu0 %v522
        %535 = vmatpush.msra.mxu0 %v521
        %536 = vmatpush.msra.mxu0 %v520
        %537 = vmatpush.msra.mxu0 %v519
        %538 = vmatpush.msra.mxu0 %v518
        %539 = vmatpush.msra.mxu0 %v517
        %540 = vmatpush.msra.mxu0 %v516
        %541 = vmatpush.msra.mxu0 %v515
        %542 = vmatpush.msra.mxu0 %v514
        %543 = vmatpush.msra.mxu0 %v513
        %544 = vmatpush.msra.mxu0 %v512
        %545 = vmatpush.msra.mxu0 %v511
        %546 = vmatpush.msra.mxu0 %v510
        %547 = vmatmul.f32.gmra.mxu0 %v508
        %v548 = vpop.f32.mrf.mxu0
        %v549 = vadd.f32 %v529, %v548
        %550 = vdwg.mxu0
        %v551 = vmax.f32 %v549, 0.0
        %v552 = vld [vmem:[#allocation5] sm:$0xff]
        %v553 = vld [vmem:[#allocation5 + $0x8] sm:$0xff]
        %v554 = vld [vmem:[#allocation5 + $0x10] sm:$0xff]
        %v555 = vld [vmem:[#allocation5 + $0x18] sm:$0xff]
        %v556 = vld [vmem:[#allocation5 + $0x20] sm:$0xff]
        %v557 = vld [vmem:[#allocation5 + $0x28] sm:$0xff]
        %v558 = vld [vmem:[#allocation5 + $0x30] sm:$0xff]
        %v559 = vld [vmem:[#allocation5 + $0x38] sm:$0xff]
        %v560 = vld [vmem:[#allocation5 + $0x40] sm:$0xff]
        %v561 = vld [vmem:[#allocation5 + $0x48] sm:$0xff]
        %v562 = vld [vmem:[#allocation5 + $0x50] sm:$0xff]
        %v563 = vld [vmem:[#allocation5 + $0x58] sm:$0xff]
        %v564 = vld [vmem:[#allocation5 + $0x60] sm:$0xff]
        %v565 = vld [vmem:[#allocation5 + $0x68] sm:$0xff]
        %v566 = vld [vmem:[#allocation5 + $0x70] sm:$0xff]
        %v567 = vld [vmem:[#allocation5 + $0x78] sm:$0xff]
        %v568 = vld [vmem:[%s6] sm:$0x1]
        %v570 = vperm.slane %v568, 0
        %572 = vmatpush.msra.mxu0 %v567
        %573 = vmatpush.msra.mxu0 %v566
        %574 = vmatpush.msra.mxu0 %v565
        %575 = vmatpush.msra.mxu0 %v564
        %576 = vmatpush.msra.mxu0 %v563
        %577 = vmatpush.msra.mxu0 %v562
        %578 = vmatpush.msra.mxu0 %v561
        %579 = vmatpush.msra.mxu0 %v560
        %580 = vmatpush.msra.mxu0 %v559
        %581 = vmatpush.msra.mxu0 %v558
        %582 = vmatpush.msra.mxu0 %v557
        %583 = vmatpush.msra.mxu0 %v556
        %584 = vmatpush.msra.mxu0 %v555
        %585 = vmatpush.msra.mxu0 %v554
        %586 = vmatpush.msra.mxu0 %v553
        %587 = vmatpush.msra.mxu0 %v552
        %588 = vmatmul.f32.gmra.mxu0 %v551
        %v589 = vpop.f32.mrf.mxu0
        %v590 = vadd.f32 %v570, %v589
        %591 = vdwg.mxu0
        %592 = vst [vmem:[%s303] sm:$0xff] %v590
        %s593 = sand.u32 %s183, 1
        %s594 = scalar_lea.sflag [#allocation4], %s593
        %s595 = sand.u32 %s183, 1
        %s596 = smul.addr %s595, 8
        %s597 = scalar_lea.vmem [#allocation7], %s596
        // Predicated region
        $region57: #{tpu_custom_call.1} parent=47 // pred_check
          %p598 = pneg %p193
        $region58: #{tpu_custom_call.1} parent=47 // pred_check_branch
          %600 = sbr.rel (%p598) target = $region60
        $region59: #{tpu_custom_call.1} parent=47 // pred_region
          %602 = vsyncadd %s594, 0
          %s603 = smul.addr %s23, 8
          %s604 = scalar_lea.hbm %s7, %s603
          %s606 = sshll.u32 %s597, 4
          %s607 = int_to_ptr.vmem [resolvable:$true] %s606
          %s608 = sshll.u32 %s604, 4
          %s609 = int_to_ptr.hbm [resolvable:$true] %s608
          %611 = dma.vmem_to_hbm [thread:$0]  %s607, 128, %s609, %s594
        $region60: #{tpu_custom_call.1} parent=47 // pred_fallthru
          _
      $region48: #{tpu_custom_call.1} parent=5 // pred_fallthru
        _
      %p612 = scmp.le.s32.totalorder 2, %s18
      // Predicated region
      $region61: #{tpu_custom_call.1} parent=5 // pred_check
        %p613 = pneg %p612
      $region62: #{tpu_custom_call.1} parent=5 // pred_check_branch
        %615 = sbr.rel (%p613) target = $region64
      $region63: #{tpu_custom_call.1} parent=5 // pred_region
        %s616 = ssub.s32 %s18, 2
        // Predicated region
        $region65: #{tpu_custom_call.1} parent=63 // pred_check
          %p617 = pneg %p199
        $region66: #{tpu_custom_call.1} parent=63 // pred_check_branch
          %619 = sbr.rel (%p617) target = $region68
        $region67: #{tpu_custom_call.1} parent=63 // pred_region
          %s620 = sand.u32 %s184, 1
          %s621 = scalar_lea.sflag [#allocation4], %s620
          %s622 = sand.u32 %s184, 1
          %s623 = smul.addr %s622, 8
          %s624 = scalar_lea.vmem [#allocation7], %s623
          %626 = dma.done %s621, 128
        $region68: #{tpu_custom_call.1} parent=63 // pred_fallthru
          _
      $region64: #{tpu_custom_call.1} parent=5 // pred_fallthru
        _
    $region6: #{tpu_custom_call.1} parent=1 // loop_footer
      %s22 = sadd.s32 1, %s18
    $region7: #{tpu_custom_call.1} parent=1 // loop_footer_branch
      %17 = sbr.rel target = $region3
    $region8: #{tpu_custom_call.1} parent=1 // loop_exit
      _
    %627 = vsyncpa [#allocation3], 1
    %s628 = scalar_lea.sflag [#allocation3], 1
    %629 = vsyncpa %s628, 1
    %630 = vsyncpa [#allocation6], 1
    %631 = vsyncpa [#allocation4], 1
    %s632 = scalar_lea.sflag [#allocation4], 1
    %633 = vsyncpa %s632, 1

// kernel: tpu_custom_call.1
$region0: #{tpu_custom_call.1}
  #allocation0 [shape = 'u32[]', space=smem, size = 0x4, offset = 0x4, fixed_abs, tag = 'smem constant byte address 0x4 - core index']
  #allocation1 [shape = 'u32[72,128]{1,0:T(1,128)}', space=vmem, size = 0x9000, scoped, tag = 'internal scratch']
  %s0 = inlined_call_operand.vmem [shape: f32[16,8], index: 0, kind: input, shape index: {}]
  %s1 = inlined_call_operand.vmem [shape: f32[8,128], index: 1, kind: input, shape index: {}]
  %s2 = inlined_call_operand.vmem [shape: f32[1,128], index: 2, kind: input, shape index: {}]
  %s3 = inlined_call_operand.hbm [shape: f32[5,128,128], index: 3, kind: input, shape index: {}]
  %s4 = inlined_call_operand.vmem [shape: f32[5,1,128], index: 4, kind: input, shape index: {}]
  %s5 = inlined_call_operand.hbm [shape: f32[128,128], index: 5, kind: input, shape index: {}]
  %s6 = inlined_call_operand.vmem [shape: f32[1,128], index: 6, kind: input, shape index: {}]
  %s7 = inlined_call_operand.hbm [shape: f32[16,128], index: 7, kind: output, shape index: {}]
  %s8 = sld [smem:[#allocation0]]
  $region69: #{tpu_custom_call.1} parent=0
    _
  %s10 = ssub.s32 1, %s8
  %s11 = scalar_select 0, %s10, %s8
  $region1: #{tpu_custom_call.1} parent=0
    #allocation2 [shape = 'u8[327680]{0}', space=vmem, size = 0x50000, scoped, tag = 'input window, operand 3, single buffered']
    #allocation3 [shape = 's32[2]{0}', space=sflag, size = 0x8, scoped, tag = 'scoped memory for tpu_custom_call.1']
    #allocation4 [shape = 's32[2]{0}', space=sflag, size = 0x8, scoped, tag = 'scoped memory for tpu_custom_call.1']
    #allocation5 [shape = 'u8[65536]{0}', space=vmem, size = 0x10000, scoped, tag = 'input window, operand 5, single buffered']
    #allocation6 [shape = 's32[1]{0}', space=sflag, size = 0x4, scoped, tag = 'scoped memory for tpu_custom_call.1']
    #allocation7 [shape = 'u8[8192]{0}', space=vmem, size = 0x2000, scoped, tag = 'output window, operand 0']
    %12 = vsyncpa [#allocation3], 0
    %13 = vsyncpa [#allocation6], 0
    %14 = vsyncpa [#allocation4], 0
    %s15 = scalar_lea.sflag [#allocation4], 1
    %16 = vsyncpa %s15, 0
    loop: start=0, step=1, limit=4
    $region2: #{tpu_custom_call.1} parent=1 // loop_pre_header
      _
    $region3: #{tpu_custom_call.1} parent=1 // loop_header
      %s18 = sphi 0, %s22
      %p19 = scmp.ge.s32.totalorder %s18, 4
      %s28 = sphi 0, %s30
      %s31 = sphi 0, %s28
      %s32 = sphi 0, %s31
      %s48 = sphi 0, %s32
      %s52 = sphi 0, %s52
      %s54 = sphi 0, %s52
      %s55 = sphi 0, %s54
      %s69 = sphi 0, %s55
      %s73 = sphi 0, %s73
      %s75 = sphi 0, %s73
      %s76 = sphi 0, %s75
      %s90 = sphi 0, %s76
      %s94 = sphi 0, %s94
      %s96 = sphi 0, %s94
      %s97 = sphi 0, %s96
      %s111 = sphi 0, %s97
      %s115 = sphi 0, %s115
      %s117 = sphi 0, %s115
      %s118 = sphi 0, %s117
      %s132 = sphi 0, %s118
      %s136 = sphi 0, %s136
      %s138 = sphi 0, %s136
      %s139 = sphi 0, %s138
      %s153 = sphi 0, %s139
      %s157 = sphi 0, %s157
      %s159 = sphi 0, %s157
      %s160 = sphi 0, %s159
      %s174 = sphi 0, %s160
      %s180 = sphi 0, %s182
      %s183 = sphi 0, %s180
      %s184 = sphi 0, %s183
      %s200 = sphi 0, %s184
    $region4: #{tpu_custom_call.1} parent=1 // loop_header_branch
      %21 = sbr.rel (%p19) target = $region8
    $region5: #{tpu_custom_call.1} parent=1 // loop_body
      %s23 = ssub.s32 %s18, 1
      %s24 = ssub.s32 %s18, 2
      %s25 = sadd.s32 %s18, 1
      %s26 = ssub.s32 %s18, %s25
      %p27 = scmp.eq.s32.totalorder %s26, 0
      %s29 = sadd.s32 %s28, 1
      %s30 = scalar_select %p27, %s28, %s29
      %p33 = pneg %p27
      %p34 = scmp.eq.s32.totalorder %s18, 1
      %p35 = por %p33, %p34
      %p36 = scmp.ne.s32.totalorder %s28, %s31
      %p37 = scmp.eq.s32.totalorder %s18, 0
      %p38 = por %p36, %p37
      %p39 = scmp.ne.s32.totalorder %s28, %s31
      %p40 = scmp.eq.s32.totalorder %s23, 1
      %p41 = por %p39, %p40
      %p42 = scmp.ne.s32.totalorder %s31, %s32
      %p43 = scmp.eq.s32.totalorder %s23, 0
      %p44 = por %p42, %p43
      %p45 = scmp.ne.s32.totalorder %s31, %s32
      %p46 = scmp.eq.s32.totalorder %s24, 1
      %p47 = por %p45, %p46
      %p49 = scmp.ne.s32.totalorder %s32, %s48
      %p50 = scmp.eq.s32.totalorder %s24, 0
      %p51 = por %p49, %p50
      %s53 = sadd.s32 %s52, 1
      %p56 = scmp.eq.s32.totalorder %s18, 1
      %p57 = scmp.ne.s32.totalorder %s52, %s54
      %p58 = scmp.eq.s32.totalorder %s18, 0
      %p59 = por %p57, %p58
      %p60 = scmp.ne.s32.totalorder %s52, %s54
      %p61 = scmp.eq.s32.totalorder %s23, 1
      %p62 = por %p60, %p61
      %p63 = scmp.ne.s32.totalorder %s54, %s55
      %p64 = scmp.eq.s32.totalorder %s23, 0
      %p65 = por %p63, %p64
      %p66 = scmp.ne.s32.totalorder %s54, %s55
      %p67 = scmp.eq.s32.totalorder %s24, 1
      %p68 = por %p66, %p67
      %p70 = scmp.ne.s32.totalorder %s55, %s69
      %p71 = scmp.eq.s32.totalorder %s24, 0
      %p72 = por %p70, %p71
      %s74 = sadd.s32 %s73, 1
      %p77 = scmp.eq.s32.totalorder %s18, 1
      %p78 = scmp.ne.s32.totalorder %s73, %s75
      %p79 = scmp.eq.s32.totalorder %s18, 0
      %p80 = por %p78, %p79
      %p81 = scmp.ne.s32.totalorder %s73, %s75
      %p82 = scmp.eq.s32.totalorder %s23, 1
      %p83 = por %p81, %p82
      %p84 = scmp.ne.s32.totalorder %s75, %s76
      %p85 = scmp.eq.s32.totalorder %s23, 0
      %p86 = por %p84, %p85
      %p87 = scmp.ne.s32.totalorder %s75, %s76
      %p88 = scmp.eq.s32.totalorder %s24, 1
      %p89 = por %p87, %p88
      %p91 = scmp.ne.s32.totalorder %s76, %s90
      %p92 = scmp.eq.s32.totalorder %s24, 0
      %p93 = por %p91, %p92
      %s95 = sadd.s32 %s94, 1
      %p98 = scmp.eq.s32.totalorder %s18, 1
      %p99 = scmp.ne.s32.totalorder %s94, %s96
      %p100 = scmp.eq.s32.totalorder %s18, 0
      %p101 = por %p99, %p100
      %p102 = scmp.ne.s32.totalorder %s94, %s96
      %p103 = scmp.eq.s32.totalorder %s23, 1
      %p104 = por %p102, %p103
      %p105 = scmp.ne.s32.totalorder %s96, %s97
      %p106 = scmp.eq.s32.totalorder %s23, 0
      %p107 = por %p105, %p106
      %p108 = scmp.ne.s32.totalorder %s96, %s97
      %p109 = scmp.eq.s32.totalorder %s24, 1
      %p110 = por %p108, %p109
      %p112 = scmp.ne.s32.totalorder %s97, %s111
      %p113 = scmp.eq.s32.totalorder %s24, 0
      %p114 = por %p112, %p113
      %s116 = sadd.s32 %s115, 1
      %p119 = scmp.eq.s32.totalorder %s18, 1
      %p120 = scmp.ne.s32.totalorder %s115, %s117
      %p121 = scmp.eq.s32.totalorder %s18, 0
      %p122 = por %p120, %p121
      %p123 = scmp.ne.s32.totalorder %s115, %s117
      %p124 = scmp.eq.s32.totalorder %s23, 1
      %p125 = por %p123, %p124
      %p126 = scmp.ne.s32.totalorder %s117, %s118
      %p127 = scmp.eq.s32.totalorder %s23, 0
      %p128 = por %p126, %p127
      %p129 = scmp.ne.s32.totalorder %s117, %s118
      %p130 = scmp.eq.s32.totalorder %s24, 1
      %p131 = por %p129, %p130
      %p133 = scmp.ne.s32.totalorder %s118, %s132
      %p134 = scmp.eq.s32.totalorder %s24, 0
      %p135 = por %p133, %p134
      %s137 = sadd.s32 %s136, 1
      %p140 = scmp.eq.s32.totalorder %s18, 1
      %p141 = scmp.ne.s32.totalorder %s136, %s138
      %p142 = scmp.eq.s32.totalorder %s18, 0
      %p143 = por %p141, %p142
      %p144 = scmp.ne.s32.totalorder %s136, %s138
      %p145 = scmp.eq.s32.totalorder %s23, 1
      %p146 = por %p144, %p145
      %p147 = scmp.ne.s32.totalorder %s138, %s139
      %p148 = scmp.eq.s32.totalorder %s23, 0
      %p149 = por %p147, %p148
      %p150 = scmp.ne.s32.totalorder %s138, %s139
      %p151 = scmp.eq.s32.totalorder %s24, 1
      %p152 = por %p150, %p151
      %p154 = scmp.ne.s32.totalorder %s139, %s153
      %p155 = scmp.eq.s32.totalorder %s24, 0
      %p156 = por %p154, %p155
      %s158 = sadd.s32 %s157, 1
      %p161 = scmp.eq.s32.totalorder %s18, 1
      %p162 = scmp.ne.s32.totalorder %s157, %s159
      %p163 = scmp.eq.s32.totalorder %s18, 0
      %p164 = por %p162, %p163
      %p165 = scmp.ne.s32.totalorder %s157, %s159
      %p166 = scmp.eq.s32.totalorder %s23, 1
      %p167 = por %p165, %p166
      %p168 = scmp.ne.s32.totalorder %s159, %s160
      %p169 = scmp.eq.s32.totalorder %s23, 0
      %p170 = por %p168, %p169
      %p171 = scmp.ne.s32.totalorder %s159, %s160
      %p172 = scmp.eq.s32.totalorder %s24, 1
      %p173 = por %p171, %p172
      %p175 = scmp.ne.s32.totalorder %s160, %s174
      %p176 = scmp.eq.s32.totalorder %s24, 0
      %p177 = por %p175, %p176
      %s178 = ssub.s32 %s18, %s25
      %p179 = scmp.eq.s32.totalorder %s178, 0
      %s181 = sadd.s32 %s180, 1
      %s182 = scalar_select %p179, %s180, %s181
      %p185 = pneg %p179
      %p186 = scmp.eq.s32.totalorder %s18, 1
      %p187 = por %p185, %p186
      %p188 = scmp.ne.s32.totalorder %s180, %s183
      %p189 = scmp.eq.s32.totalorder %s18, 0
      %p190 = por %p188, %p189
      %p191 = scmp.ne.s32.totalorder %s180, %s183
      %p192 = scmp.eq.s32.totalorder %s23, 1
      %p193 = por %p191, %p192
      %p194 = scmp.ne.s32.totalorder %s183, %s184
      %p195 = scmp.eq.s32.totalorder %s23, 0
      %p196 = por %p194, %p195
      %p197 = scmp.ne.s32.totalorder %s183, %s184
      %p198 = scmp.eq.s32.totalorder %s24, 1
      %p199 = por %p197, %p198
      %p201 = scmp.ne.s32.totalorder %s184, %s200
      %p202 = scmp.eq.s32.totalorder %s24, 0
      %p203 = por %p201, %p202
      %p204 = scmp.le.s32.totalorder 1, %s18
      %p205 = scmp.lt.s32.totalorder %s18, 3
      %p206 = pnand %p204, %p205
      %p207 = pneg %p206
      // Predicated region
      $region9: #{tpu_custom_call.1} parent=5 // pred_check
        _
      $region10: #{tpu_custom_call.1} parent=5 // pred_check_branch
        %209 = sbr.rel (%p206) target = $region12
      $region11: #{tpu_custom_call.1} parent=5 // pred_region
        %s210 = ssub.s32 %s18, 1
        // Predicated region
        $region13: #{tpu_custom_call.1} parent=11 // pred_check
          %p211 = pneg %p65
        $region14: #{tpu_custom_call.1} parent=11 // pred_check_branch
          %213 = sbr.rel (%p211) target = $region16
        $region15: #{tpu_custom_call.1} parent=11 // pred_region
          _
        $region16: #{tpu_custom_call.1} parent=11 // pred_fallthru
          _
        // Predicated region
        $region17: #{tpu_custom_call.1} parent=11 // pred_check
          %p214 = pneg %p86
        $region18: #{tpu_custom_call.1} parent=11 // pred_check_branch
          %216 = sbr.rel (%p214) target = $region20
        $region19: #{tpu_custom_call.1} parent=11 // pred_region
          _
        $region20: #{tpu_custom_call.1} parent=11 // pred_fallthru
          _
        // Predicated region
        $region21: #{tpu_custom_call.1} parent=11 // pred_check
          %p217 = pneg %p107
        $region22: #{tpu_custom_call.1} parent=11 // pred_check_branch
          %219 = sbr.rel (%p217) target = $region24
        $region23: #{tpu_custom_call.1} parent=11 // pred_region
          %221 = vsyncadd [#allocation3], 0
          %s222 = sshll.u32 %s3, 4
          %s223 = int_to_ptr.hbm [resolvable:$true] %s222
          %s224 = sshll.u32 [#allocation2], 4
          %s225 = int_to_ptr.vmem [resolvable:$true] %s224
          %230 = dma.hbm_to_vmem [thread:$0]  %s223, 10240, %s225, [#allocation3], 128, 128, 8
        $region24: #{tpu_custom_call.1} parent=11 // pred_fallthru
          _
        // Predicated region
        $region25: #{tpu_custom_call.1} parent=11 // pred_check
          %p231 = pneg %p128
        $region26: #{tpu_custom_call.1} parent=11 // pred_check_branch
          %233 = sbr.rel (%p231) target = $region28
        $region27: #{tpu_custom_call.1} parent=11 // pred_region
          _
        $region28: #{tpu_custom_call.1} parent=11 // pred_fallthru
          _
        // Predicated region
        $region29: #{tpu_custom_call.1} parent=11 // pred_check
          %p234 = pneg %p149
        $region30: #{tpu_custom_call.1} parent=11 // pred_check_branch
          %236 = sbr.rel (%p234) target = $region32
        $region31: #{tpu_custom_call.1} parent=11 // pred_region
          %238 = vsyncadd [#allocation6], 0
          %s239 = sshll.u32 %s5, 4
          %s240 = int_to_ptr.hbm [resolvable:$true] %s239
          %s241 = sshll.u32 [#allocation5], 4
          %s242 = int_to_ptr.vmem [resolvable:$true] %s241
          %247 = dma.hbm_to_vmem [thread:$0]  %s240, 2048, %s242, [#allocation6], 128, 128, 8
        $region32: #{tpu_custom_call.1} parent=11 // pred_fallthru
          _
        // Predicated region
        $region33: #{tpu_custom_call.1} parent=11 // pred_check
          %p248 = pneg %p170
        $region34: #{tpu_custom_call.1} parent=11 // pred_check_branch
          %250 = sbr.rel (%p248) target = $region36
        $region35: #{tpu_custom_call.1} parent=11 // pred_region
          _
        $region36: #{tpu_custom_call.1} parent=11 // pred_fallthru
          _
      $region12: #{tpu_custom_call.1} parent=5 // pred_fallthru
        _
      %p251 = scmp.lt.s32.totalorder %s18, 2
      // Predicated region
      $region37: #{tpu_custom_call.1} parent=5 // pred_check
        %p252 = pneg %p251
      $region38: #{tpu_custom_call.1} parent=5 // pred_check_branch
        %254 = sbr.rel (%p252) target = $region40
      $region39: #{tpu_custom_call.1} parent=5 // pred_region
        // Predicated region
        $region41: #{tpu_custom_call.1} parent=39 // pred_check
          %p255 = pneg %p38
        $region42: #{tpu_custom_call.1} parent=39 // pred_check_branch
          %257 = sbr.rel (%p255) target = $region44
        $region43: #{tpu_custom_call.1} parent=39 // pred_region
          %p258 = scmp.lt.s32.totalorder %s18, 1
          %s259 = scalar_select %p258, %s18, 1
          %s260 = smul.addr %s259, 8
          %s261 = scalar_lea.vmem %s0, %s260
        $region44: #{tpu_custom_call.1} parent=39 // pred_fallthru
          _
      $region40: #{tpu_custom_call.1} parent=5 // pred_fallthru
        _
      %p262 = scmp.le.s32.totalorder 1, %s18
      %p263 = scmp.lt.s32.totalorder %s18, 3
      %p264 = pnand %p262, %p263
      %p265 = pneg %p264
      // Predicated region
      $region45: #{tpu_custom_call.1} parent=5 // pred_check
        _
      $region46: #{tpu_custom_call.1} parent=5 // pred_check_branch
        %267 = sbr.rel (%p264) target = $region48
      $region47: #{tpu_custom_call.1} parent=5 // pred_region
        %s268 = ssub.s32 %s18, 1
        // Predicated region
        $region49: #{tpu_custom_call.1} parent=47 // pred_check
          %p269 = pneg %p107
        $region50: #{tpu_custom_call.1} parent=47 // pred_check_branch
          %271 = sbr.rel (%p269) target = $region52
        $region51: #{tpu_custom_call.1} parent=47 // pred_region
          %273 = dma.done [#allocation3], 10240
        $region52: #{tpu_custom_call.1} parent=47 // pred_fallthru
          _
        // Predicated region
        $region53: #{tpu_custom_call.1} parent=47 // pred_check
          %p274 = pneg %p149
        $region54: #{tpu_custom_call.1} parent=47 // pred_check_branch
          %276 = sbr.rel (%p274) target = $region56
        $region55: #{tpu_custom_call.1} parent=47 // pred_region
          %278 = dma.done [#allocation6], 2048
        $region56: #{tpu_custom_call.1} parent=47 // pred_fallthru
          _
        %p279 = scmp.lt.s32.totalorder %s23, 1
        %s280 = scalar_select %p279, %s23, 1
        %s281 = smul.addr %s280, 8
        %s282 = scalar_lea.vmem %s0, %s281
        %p283 = pneg %p44
        %p284 = pneg %p41
        %p285 = pneg %p65
        %p286 = pneg %p62
        %p287 = pneg %p86
        %p288 = pneg %p83
        %p289 = pneg %p107
        %p290 = pneg %p104
        %p291 = pneg %p128
        %p292 = pneg %p125
        %p293 = pneg %p149
        %p294 = pneg %p146
        %p295 = pneg %p170
        %p296 = pneg %p167
        %p297 = pneg %p196
        %p298 = pneg %p193
        %s299 = sand.u32 %s183, 1
        %s300 = scalar_lea.sflag [#allocation4], %s299
        %s301 = sand.u32 %s183, 1
        %s302 = smul.addr %s301, 8
        %s303 = scalar_lea.vmem [#allocation7], %s302
        %p304 = scmp.lt.s32.totalorder %s23, 1
        %s305 = scalar_select %p304, %s23, 1
        %s306 = smul.addr %s305, 8
        %s307 = scalar_lea.vmem %s0, %s306
        %v308 = vld [vmem:[%s307] sm:$0xff]
        %v309 = vld [vmem:[%s1] sm:$0xff]
        %v310 = vld [vmem:[%s2] sm:$0x1]
        %v312 = vperm.slane %v310, 0
        %vm314 = vcmask 64512
        %v316 = vsel %vm314, %v308, 0
        %318 = vmatpush.msra.mxu0 0.0
        %319 = vmatpush.msra.mxu0 0.0
        %320 = vmatpush.msra.mxu0 0.0
        %321 = vmatpush.msra.mxu0 0.0
        %322 = vmatpush.msra.mxu0 0.0
        %323 = vmatpush.msra.mxu0 0.0
        %324 = vmatpush.msra.mxu0 0.0
        %325 = vmatpush.msra.mxu0 0.0
        %326 = vmatpush.msra.mxu0 0.0
        %327 = vmatpush.msra.mxu0 0.0
        %328 = vmatpush.msra.mxu0 0.0
        %329 = vmatpush.msra.mxu0 0.0
        %330 = vmatpush.msra.mxu0 0.0
        %331 = vmatpush.msra.mxu0 0.0
        %332 = vmatpush.msra.mxu0 0.0
        %333 = vmatpush.msra.mxu0 %v309
        %334 = vmatmul.f32.gmra.mxu0 %v316
        %v335 = vpop.f32.mrf.mxu0
        %v336 = vadd.f32 %v312, %v335
        %337 = vdwg.mxu0
        %v338 = vmax.f32 %v336, 0.0
        %v339 = vld [vmem:[#allocation2] sm:$0xff]
        %v340 = vld [vmem:[#allocation2 + $0x8] sm:$0xff]
        %v341 = vld [vmem:[#allocation2 + $0x10] sm:$0xff]
        %v342 = vld [vmem:[#allocation2 + $0x18] sm:$0xff]
        %v343 = vld [vmem:[#allocation2 + $0x20] sm:$0xff]
        %v344 = vld [vmem:[#allocation2 + $0x28] sm:$0xff]
        %v345 = vld [vmem:[#allocation2 + $0x30] sm:$0xff]
        %v346 = vld [vmem:[#allocation2 + $0x38] sm:$0xff]
        %v347 = vld [vmem:[#allocation2 + $0x40] sm:$0xff]
        %v348 = vld [vmem:[#allocation2 + $0x48] sm:$0xff]
        %v349 = vld [vmem:[#allocation2 + $0x50] sm:$0xff]
        %v350 = vld [vmem:[#allocation2 + $0x58] sm:$0xff]
        %v351 = vld [vmem:[#allocation2 + $0x60] sm:$0xff]
        %v352 = vld [vmem:[#allocation2 + $0x68] sm:$0xff]
        %v353 = vld [vmem:[#allocation2 + $0x70] sm:$0xff]
        %v354 = vld [vmem:[#allocation2 + $0x78] sm:$0xff]
        %v355 = vld [vmem:[%s4] sm:$0x1]
        %v357 = vperm.slane %v355, 0
        %359 = vmatpush.msra.mxu0 %v354
        %360 = vmatpush.msra.mxu0 %v353
        %361 = vmatpush.msra.mxu0 %v352
        %362 = vmatpush.msra.mxu0 %v351
        %363 = vmatpush.msra.mxu0 %v350
        %364 = vmatpush.msra.mxu0 %v349
        %365 = vmatpush.msra.mxu0 %v348
        %366 = vmatpush.msra.mxu0 %v347
        %367 = vmatpush.msra.mxu0 %v346
        %368 = vmatpush.msra.mxu0 %v345
        %369 = vmatpush.msra.mxu0 %v344
        %370 = vmatpush.msra.mxu0 %v343
        %371 = vmatpush.msra.mxu0 %v342
        %372 = vmatpush.msra.mxu0 %v341
        %373 = vmatpush.msra.mxu0 %v340
        %374 = vmatpush.msra.mxu0 %v339
        %375 = vmatmul.f32.gmra.mxu0 %v338
        %v376 = vpop.f32.mrf.mxu0
        %v377 = vadd.f32 %v357, %v376
        %378 = vdwg.mxu0
        %v379 = vmax.f32 %v377, 0.0
        %s380 = scalar_lea.vmem [#allocation2], 128
        %v381 = vld [vmem:[%s380] sm:$0xff]
        %v382 = vld [vmem:[%s380 + $0x8] sm:$0xff]
        %v383 = vld [vmem:[%s380 + $0x10] sm:$0xff]
        %v384 = vld [vmem:[%s380 + $0x18] sm:$0xff]
        %v385 = vld [vmem:[%s380 + $0x20] sm:$0xff]
        %v386 = vld [vmem:[%s380 + $0x28] sm:$0xff]
        %v387 = vld [vmem:[%s380 + $0x30] sm:$0xff]
        %v388 = vld [vmem:[%s380 + $0x38] sm:$0xff]
        %v389 = vld [vmem:[%s380 + $0x40] sm:$0xff]
        %v390 = vld [vmem:[%s380 + $0x48] sm:$0xff]
        %v391 = vld [vmem:[%s380 + $0x50] sm:$0xff]
        %v392 = vld [vmem:[%s380 + $0x58] sm:$0xff]
        %v393 = vld [vmem:[%s380 + $0x60] sm:$0xff]
        %v394 = vld [vmem:[%s380 + $0x68] sm:$0xff]
        %v395 = vld [vmem:[%s380 + $0x70] sm:$0xff]
        %v396 = vld [vmem:[%s380 + $0x78] sm:$0xff]
        %s397 = scalar_lea.vmem %s4, 1
        %v398 = vld [vmem:[%s397] sm:$0x1]
        %v400 = vperm.slane %v398, 0
        %402 = vmatpush.msra.mxu0 %v396
        %403 = vmatpush.msra.mxu0 %v395
        %404 = vmatpush.msra.mxu0 %v394
        %405 = vmatpush.msra.mxu0 %v393
        %406 = vmatpush.msra.mxu0 %v392
        %407 = vmatpush.msra.mxu0 %v391
        %408 = vmatpush.msra.mxu0 %v390
        %409 = vmatpush.msra.mxu0 %v389
        %410 = vmatpush.msra.mxu0 %v388
        %411 = vmatpush.msra.mxu0 %v387
        %412 = vmatpush.msra.mxu0 %v386
        %413 = vmatpush.msra.mxu0 %v385
        %414 = vmatpush.msra.mxu0 %v384
        %415 = vmatpush.msra.mxu0 %v383
        %416 = vmatpush.msra.mxu0 %v382
        %417 = vmatpush.msra.mxu0 %v381
        %418 = vmatmul.f32.gmra.mxu0 %v379
        %v419 = vpop.f32.mrf.mxu0
        %v420 = vadd.f32 %v400, %v419
        %421 = vdwg.mxu0
        %v422 = vmax.f32 %v420, 0.0
        %s423 = scalar_lea.vmem [#allocation2], 256
        %v424 = vld [vmem:[%s423] sm:$0xff]
        %v425 = vld [vmem:[%s423 + $0x8] sm:$0xff]
        %v426 = vld [vmem:[%s423 + $0x10] sm:$0xff]
        %v427 = vld [vmem:[%s423 + $0x18] sm:$0xff]
        %v428 = vld [vmem:[%s423 + $0x20] sm:$0xff]
        %v429 = vld [vmem:[%s423 + $0x28] sm:$0xff]
        %v430 = vld [vmem:[%s423 + $0x30] sm:$0xff]
        %v431 = vld [vmem:[%s423 + $0x38] sm:$0xff]
        %v432 = vld [vmem:[%s423 + $0x40] sm:$0xff]
        %v433 = vld [vmem:[%s423 + $0x48] sm:$0xff]
        %v434 = vld [vmem:[%s423 + $0x50] sm:$0xff]
        %v435 = vld [vmem:[%s423 + $0x58] sm:$0xff]
        %v436 = vld [vmem:[%s423 + $0x60] sm:$0xff]
        %v437 = vld [vmem:[%s423 + $0x68] sm:$0xff]
        %v438 = vld [vmem:[%s423 + $0x70] sm:$0xff]
        %v439 = vld [vmem:[%s423 + $0x78] sm:$0xff]
        %s440 = scalar_lea.vmem %s4, 2
        %v441 = vld [vmem:[%s440] sm:$0x1]
        %v443 = vperm.slane %v441, 0
        %445 = vmatpush.msra.mxu0 %v439
        %446 = vmatpush.msra.mxu0 %v438
        %447 = vmatpush.msra.mxu0 %v437
        %448 = vmatpush.msra.mxu0 %v436
        %449 = vmatpush.msra.mxu0 %v435
        %450 = vmatpush.msra.mxu0 %v434
        %451 = vmatpush.msra.mxu0 %v433
        %452 = vmatpush.msra.mxu0 %v432
        %453 = vmatpush.msra.mxu0 %v431
        %454 = vmatpush.msra.mxu0 %v430
        %455 = vmatpush.msra.mxu0 %v429
        %456 = vmatpush.msra.mxu0 %v428
        %457 = vmatpush.msra.mxu0 %v427
        %458 = vmatpush.msra.mxu0 %v426
        %459 = vmatpush.msra.mxu0 %v425
        %460 = vmatpush.msra.mxu0 %v424
        %461 = vmatmul.f32.gmra.mxu0 %v422
        %v462 = vpop.f32.mrf.mxu0
        %v463 = vadd.f32 %v443, %v462
        %464 = vdwg.mxu0
        %v465 = vmax.f32 %v463, 0.0
        %s466 = scalar_lea.vmem [#allocation2], 384
        %v467 = vld [vmem:[%s466] sm:$0xff]
        %v468 = vld [vmem:[%s466 + $0x8] sm:$0xff]
        %v469 = vld [vmem:[%s466 + $0x10] sm:$0xff]
        %v470 = vld [vmem:[%s466 + $0x18] sm:$0xff]
        %v471 = vld [vmem:[%s466 + $0x20] sm:$0xff]
        %v472 = vld [vmem:[%s466 + $0x28] sm:$0xff]
        %v473 = vld [vmem:[%s466 + $0x30] sm:$0xff]
        %v474 = vld [vmem:[%s466 + $0x38] sm:$0xff]
        %v475 = vld [vmem:[%s466 + $0x40] sm:$0xff]
        %v476 = vld [vmem:[%s466 + $0x48] sm:$0xff]
        %v477 = vld [vmem:[%s466 + $0x50] sm:$0xff]
        %v478 = vld [vmem:[%s466 + $0x58] sm:$0xff]
        %v479 = vld [vmem:[%s466 + $0x60] sm:$0xff]
        %v480 = vld [vmem:[%s466 + $0x68] sm:$0xff]
        %v481 = vld [vmem:[%s466 + $0x70] sm:$0xff]
        %v482 = vld [vmem:[%s466 + $0x78] sm:$0xff]
        %s483 = scalar_lea.vmem %s4, 3
        %v484 = vld [vmem:[%s483] sm:$0x1]
        %v486 = vperm.slane %v484, 0
        %488 = vmatpush.msra.mxu0 %v482
        %489 = vmatpush.msra.mxu0 %v481
        %490 = vmatpush.msra.mxu0 %v480
        %491 = vmatpush.msra.mxu0 %v479
        %492 = vmatpush.msra.mxu0 %v478
        %493 = vmatpush.msra.mxu0 %v477
        %494 = vmatpush.msra.mxu0 %v476
        %495 = vmatpush.msra.mxu0 %v475
        %496 = vmatpush.msra.mxu0 %v474
        %497 = vmatpush.msra.mxu0 %v473
        %498 = vmatpush.msra.mxu0 %v472
        %499 = vmatpush.msra.mxu0 %v471
        %500 = vmatpush.msra.mxu0 %v470
        %501 = vmatpush.msra.mxu0 %v469
        %502 = vmatpush.msra.mxu0 %v468
        %503 = vmatpush.msra.mxu0 %v467
        %504 = vmatmul.f32.gmra.mxu0 %v465
        %v505 = vpop.f32.mrf.mxu0
        %v506 = vadd.f32 %v486, %v505
        %507 = vdwg.mxu0
        %v508 = vmax.f32 %v506, 0.0
        %s509 = scalar_lea.vmem [#allocation2], 512
        %v510 = vld [vmem:[%s509] sm:$0xff]
        %v511 = vld [vmem:[%s509 + $0x8] sm:$0xff]
        %v512 = vld [vmem:[%s509 + $0x10] sm:$0xff]
        %v513 = vld [vmem:[%s509 + $0x18] sm:$0xff]
        %v514 = vld [vmem:[%s509 + $0x20] sm:$0xff]
        %v515 = vld [vmem:[%s509 + $0x28] sm:$0xff]
        %v516 = vld [vmem:[%s509 + $0x30] sm:$0xff]
        %v517 = vld [vmem:[%s509 + $0x38] sm:$0xff]
        %v518 = vld [vmem:[%s509 + $0x40] sm:$0xff]
        %v519 = vld [vmem:[%s509 + $0x48] sm:$0xff]
        %v520 = vld [vmem:[%s509 + $0x50] sm:$0xff]
        %v521 = vld [vmem:[%s509 + $0x58] sm:$0xff]
        %v522 = vld [vmem:[%s509 + $0x60] sm:$0xff]
        %v523 = vld [vmem:[%s509 + $0x68] sm:$0xff]
        %v524 = vld [vmem:[%s509 + $0x70] sm:$0xff]
        %v525 = vld [vmem:[%s509 + $0x78] sm:$0xff]
        %s526 = scalar_lea.vmem %s4, 4
        %v527 = vld [vmem:[%s526] sm:$0x1]
        %v529 = vperm.slane %v527, 0
        %531 = vmatpush.msra.mxu0 %v525
        %532 = vmatpush.msra.mxu0 %v524
        %533 = vmatpush.msra.mxu0 %v523
        %534 = vmatpush.msra.mxu0 %v522
        %535 = vmatpush.msra.mxu0 %v521
        %536 = vmatpush.msra.mxu0 %v520
        %537 = vmatpush.msra.mxu0 %v519
        %538 = vmatpush.msra.mxu0 %v518
        %539 = vmatpush.msra.mxu0 %v517
        %540 = vmatpush.msra.mxu0 %v516
        %541 = vmatpush.msra.mxu0 %v515
        %542 = vmatpush.msra.mxu0 %v514
        %543 = vmatpush.msra.mxu0 %v513
        %544 = vmatpush.msra.mxu0 %v512
        %545 = vmatpush.msra.mxu0 %v511
        %546 = vmatpush.msra.mxu0 %v510
        %547 = vmatmul.f32.gmra.mxu0 %v508
        %v548 = vpop.f32.mrf.mxu0
        %v549 = vadd.f32 %v529, %v548
        %550 = vdwg.mxu0
        %v551 = vmax.f32 %v549, 0.0
        %v552 = vld [vmem:[#allocation5] sm:$0xff]
        %v553 = vld [vmem:[#allocation5 + $0x8] sm:$0xff]
        %v554 = vld [vmem:[#allocation5 + $0x10] sm:$0xff]
        %v555 = vld [vmem:[#allocation5 + $0x18] sm:$0xff]
        %v556 = vld [vmem:[#allocation5 + $0x20] sm:$0xff]
        %v557 = vld [vmem:[#allocation5 + $0x28] sm:$0xff]
        %v558 = vld [vmem:[#allocation5 + $0x30] sm:$0xff]
        %v559 = vld [vmem:[#allocation5 + $0x38] sm:$0xff]
        %v560 = vld [vmem:[#allocation5 + $0x40] sm:$0xff]
        %v561 = vld [vmem:[#allocation5 + $0x48] sm:$0xff]
        %v562 = vld [vmem:[#allocation5 + $0x50] sm:$0xff]
        %v563 = vld [vmem:[#allocation5 + $0x58] sm:$0xff]
        %v564 = vld [vmem:[#allocation5 + $0x60] sm:$0xff]
        %v565 = vld [vmem:[#allocation5 + $0x68] sm:$0xff]
        %v566 = vld [vmem:[#allocation5 + $0x70] sm:$0xff]
        %v567 = vld [vmem:[#allocation5 + $0x78] sm:$0xff]
        %v568 = vld [vmem:[%s6] sm:$0x1]
        %v570 = vperm.slane %v568, 0
        %572 = vmatpush.msra.mxu0 %v567
        %573 = vmatpush.msra.mxu0 %v566
        %574 = vmatpush.msra.mxu0 %v565
        %575 = vmatpush.msra.mxu0 %v564
        %576 = vmatpush.msra.mxu0 %v563
        %577 = vmatpush.msra.mxu0 %v562
        %578 = vmatpush.msra.mxu0 %v561
        %579 = vmatpush.msra.mxu0 %v560
        %580 = vmatpush.msra.mxu0 %v559
        %581 = vmatpush.msra.mxu0 %v558
        %582 = vmatpush.msra.mxu0 %v557
        %583 = vmatpush.msra.mxu0 %v556
        %584 = vmatpush.msra.mxu0 %v555
        %585 = vmatpush.msra.mxu0 %v554
        %586 = vmatpush.msra.mxu0 %v553
        %587 = vmatpush.msra.mxu0 %v552
        %588 = vmatmul.f32.gmra.mxu0 %v551
        %v589 = vpop.f32.mrf.mxu0
        %v590 = vadd.f32 %v570, %v589
        %591 = vdwg.mxu0
        %592 = vst [vmem:[%s303] sm:$0xff] %v590
        %s593 = sand.u32 %s183, 1
        %s594 = scalar_lea.sflag [#allocation4], %s593
        %s595 = sand.u32 %s183, 1
        %s596 = smul.addr %s595, 8
        %s597 = scalar_lea.vmem [#allocation7], %s596
        // Predicated region
        $region57: #{tpu_custom_call.1} parent=47 // pred_check
          %p598 = pneg %p193
        $region58: #{tpu_custom_call.1} parent=47 // pred_check_branch
          %600 = sbr.rel (%p598) target = $region60
        $region59: #{tpu_custom_call.1} parent=47 // pred_region
          %602 = vsyncadd %s594, 0
          %s603 = smul.addr %s23, 8
          %s604 = scalar_lea.hbm %s7, %s603
          %s606 = sshll.u32 %s597, 4
          %s607 = int_to_ptr.vmem [resolvable:$true] %s606
          %s608 = sshll.u32 %s604, 4
          %s609 = int_to_ptr.hbm [resolvable:$true] %s608
          %611 = dma.vmem_to_hbm [thread:$0]  %s607, 128, %s609, %s594
        $region60: #{tpu_custom_call.1} parent=47 // pred_fallthru
          _
      $region48: #{tpu_custom_call.1} parent=5 // pred_fallthru
        _
      %p612 = scmp.le.s32.totalorder 2, %s18
      // Predicated region
      $region61: #{tpu_custom_call.1} parent=5 // pred_check
        %p613 = pneg %p612
      $region62: #{tpu_custom_call.1} parent=5 // pred_check_branch
        %615 = sbr.rel (%p613) target = $region64
      $region63: #{tpu_custom_call.1} parent=5 // pred_region
        %s616 = ssub.s32 %s18, 2
        // Predicated region
        $region65: #{tpu_custom_call.1} parent=63 // pred_check
          %p617 = pneg %p199
        $region66: #{tpu_custom_call.1} parent=63 // pred_check_branch
          %619 = sbr.rel (%p617) target = $region68
        $region67: #{tpu_custom_call.1} parent=63 // pred_region
          %s620 = sand.u32 %s184, 1
          %s621 = scalar_lea.sflag [#allocation4], %s620
          %s622 = sand.u32 %s184, 1
          %s623 = smul.addr %s622, 8
          %s624 = scalar_lea.vmem [#allocation7], %s623
          %626 = dma.done %s621, 128
        $region68: #{tpu_custom_call.1} parent=63 // pred_fallthru
          _
      $region64: #{tpu_custom_call.1} parent=5 // pred_fallthru
        _
    $region6: #{tpu_custom_call.1} parent=1 // loop_footer
      %s22 = sadd.s32 1, %s18
    $region7: #{tpu_custom_call.1} parent=1 // loop_footer_branch
      %17 = sbr.rel target = $region3
    $region8: #{tpu_custom_call.1} parent=1 // loop_exit
      _
    %627 = vsyncpa [#allocation3], 1
    %s628 = scalar_lea.sflag [#allocation3], 1
    %629 = vsyncpa %s628, 1
    %630 = vsyncpa [#allocation6], 1
    %631 = vsyncpa [#allocation4], 1
    %s632 = scalar_lea.sflag [#allocation4], 1
    %633 = vsyncpa %s632, 1

</llo_original>
